<compile_context>
chip_gen: v6e
topology: v6e:2x2x1
jax: 0.10.0
libtpu: 0.0.40
codegen_flags: <defaults>
</compile_context>

<pallas_src>
import jax
import jax.numpy as jnp
import numpy as np
from jax.experimental import pallas as pl
from jax.experimental.pallas import tpu as pltpu


# ----------------------------------------------------------------------------
# Fused kernel: conv1 + bn1 + relu + conv2 + bn2 + relu + fused heads
# ----------------------------------------------------------------------------
def _build_kernel(cfg):
    (NPH, M, PAD1, groups2, PADH, groupsh, Wo, C1, C2) = cfg

    def kernel(x_ref, w1_ref, s1_ref, b1_ref,
               w2g_ref, s2_ref, b2_ref, whg_ref, bh_ref,
               ox_ref, oh_ref,
               y1_scr, y2_scr, acc2_scr, acch_scr):
        # ---- zero ONLY the pad halo rows; interior is fully overwritten -----
        # (done every grid step -- correct under megacore batch sharding)
        if PAD1 > 0:
            y1_scr[:, :PAD1, :] = jnp.zeros((NPH, PAD1, C1), y1_scr.dtype)
            y1_scr[:, PAD1 + M:, :] = jnp.zeros((NPH, PAD1, C1), y1_scr.dtype)
        if PADH > 0:
            y2_scr[:PADH, :] = jnp.zeros((PADH, C2), y2_scr.dtype)
            y2_scr[PADH + M:, :] = jnp.zeros((PADH, C2), y2_scr.dtype)

        # ---- conv1 (1x1) + BN1 + ReLU : ONE matmul over all NPH phases ------
        y1 = jnp.dot(x_ref[0], w1_ref[...], preferred_element_type=jnp.float32)
        y1 = jnp.maximum(y1 * s1_ref[...] + b1_ref[...], 0.0)
        y1 = y1.astype(y1_scr.dtype)
        for p in range(NPH):
            y1_scr[p, PAD1:PAD1 + M, :] = y1[p * M:(p + 1) * M, :]

        # ---- border masks: one per distinct nonzero qw, reused by both convs
        ow = jax.lax.broadcasted_iota(jnp.int32, (M, 1), 0) % Wo
        qws = sorted({qw for (qw, _) in groups2 if qw} |
                     {qw for (qw, _) in groupsh if qw})
        masks = {qw: ((ow + qw >= 0) & (ow + qw < Wo)).astype(jnp.float32)
                 for qw in qws}

        def cat(slices):
            if len(slices) == 1:
                return slices[0]
            return jnp.concatenate(slices, axis=1)

        # ---- conv2 (3x3, stride s) + BN2 + ReLU : one matmul per qw-group ---
        row = 0
        for gi, (qw, taps) in enumerate(groups2):
            sl = cat([y1_scr[ph, PAD1 + off:PAD1 + off + M, :]
                      for (ph, off) in taps])                       # (M, G*C1)
            part = jnp.dot(sl, w2g_ref[row:row + len(taps) * C1, :],
                           preferred_element_type=jnp.float32)
            row += len(taps) * C1
            if qw:
                part = part * masks[qw]          # single (M, C2) mask multiply
            if gi == 0:
                acc2_scr[...] = part
            else:
                acc2_scr[...] += part
        y2 = jnp.maximum(acc2_scr[...] * s2_ref[...] + b2_ref[...], 0.0)
        ox_ref[0] = y2.astype(ox_ref.dtype)
        y2_scr[PADH:PADH + M, :] = y2.astype(y2_scr.dtype)

        # ---- fused offset+confid head (kxk, stride 1, 'same') ---------------
        row = 0
        for gi, (qw, taps) in enumerate(groupsh):
            sl = cat([y2_scr[PADH + off:PADH + off + M, :]
                      for (_, off) in taps])                        # (M, G*C2)
            part = jnp.dot(sl, whg_ref[row:row + len(taps) * C2, :],
                           preferred_element_type=jnp.float32)
            row += len(taps) * C2
            if qw:
                part = part * masks[qw]          # single (M, NH) mask multiply
            if gi == 0:
                acch_scr[...] = part
            else:
                acch_scr[...] += part
        heads = acch_scr[...] + bh_ref[...]                  # (M, NH), f32
        # single small result transpose -> lane-dense (NH, M) output store
        oh_ref[0] = jnp.transpose(heads, (1, 0)).astype(oh_ref.dtype)

    return kernel


# ----------------------------------------------------------------------------
# Glue: tap decomposition / grouping, BN folding, parameter init
# ----------------------------------------------------------------------------
def _conv_tap_decomp(ksize, stride, pad):
    """kernel index k -> (phase, intra-phase shift q) for the given stride."""
    out = []
    for k in range(ksize):
        d = k - pad
        a = d % stride
        q = (d - a) // stride
        out.append((a, q))
    return out


def _build_groups(ksize, stride, pad, Wo):
    """Group conv taps by horizontal shift qw.

    Returns (groups, order, max_off):
      groups : tuple of (qw, ((phase, flat_off), ...)) in weight-row order
      order  : matching tap permutation for the (k*k, Cin, Cout) weight tensor
      max_off: bound on |flat_off| (sizes the zero-pad halo)
    """
    dec = _conv_tap_decomp(ksize, stride, pad)
    gdict = {}
    for kh in range(ksize):
        ah, qh = dec[kh]
        for kw in range(ksize):
            aw, qw = dec[kw]
            gdict.setdefault(qw, []).append(
                (kh * ksize + kw, ah * stride + aw, qh * Wo + qw))
    groups, order = [], []
    for qw in sorted(gdict):
        taps = gdict[qw]
        groups.append((qw, tuple((ph, off) for (_, ph, off) in taps)))
        order.extend(t for (t, _, _) in taps)
    max_off = max(abs(off) for (_, taps) in groups for (_, off) in taps)
    return tuple(groups), order, max_off


def fold_conv_bn(conv_bias, bn, norm, eps=1e-5):
    """Fold conv bias + eval-mode BatchNorm into per-channel scale & bias."""
    if norm:
        s = bn["gamma"] / jnp.sqrt(bn["var"] + eps)
        b = bn["beta"] + (conv_bias - bn["mean"]) * s
    else:
        s = jnp.ones_like(conv_bias)
        b = conv_bias
    return s, b


def init_params(key, channels, box_num, class_num, kernel_size=3):
    """Deterministic synthetic parameters. Conv weights stored HWIO."""
    c0, c1, c2 = channels
    keys = jax.random.split(key, 12)

    def xavier(k, shape, fan_in, fan_out):
        std = float(np.sqrt(2.0 / (fan_in + fan_out)))
        return std * jax.random.normal(k, shape, jnp.float32)

    def bn_params(kg, kb, c):
        return dict(
            gamma=1.0 + 0.1 * jax.random.normal(kg, (c,), jnp.float32),
            beta=0.1 * jax.random.normal(kb, (c,), jnp.float32),
            mean=jnp.zeros((c,), jnp.float32),
            var=jnp.ones((c,), jnp.float32),
        )

    kk = kernel_size * kernel_size
    p = {}
    p["conv1_w"] = xavier(keys[0], (1, 1, c0, c1), c0, c1)
    p["conv1_b"] = 0.01 * jax.random.normal(keys[1], (c1,), jnp.float32)
    p["conv2_w"] = xavier(keys[2], (3, 3, c1, c2), 9 * c1, 9 * c2)
    p["conv2_b"] = 0.01 * jax.random.normal(keys[3], (c2,), jnp.float32)
    p["off_w"] = xavier(keys[4], (kernel_size, kernel_size, c2, box_num * 4),
                        kk * c2, kk * box_num * 4)
    p["off_b"] = 0.01 * jax.random.normal(keys[5], (box_num * 4,), jnp.float32)
    p["conf_w"] = xavier(keys[6],
                         (kernel_size, kernel_size, c2, box_num * class_num),
                         kk * c2, kk * box_num * class_num)
    p["conf_b"] = 0.01 * jax.random.normal(keys[7], (box_num * class_num,),
                                           jnp.float32)
    p["bn1"] = bn_params(keys[8], keys[9], c1)
    p["bn2"] = bn_params(keys[10], keys[11], c2)
    return p


# ----------------------------------------------------------------------------
# Forward pass (matches ScaleMap.forward)
# ----------------------------------------------------------------------------
def scale_map_forward(x_nchw, params, box_num, class_num, second_stride,
                      second_pad, kernel_size=3, norm=True):
    B, C0, H, W = x_nchw.shape
    stride2 = int(second_stride)
    pad2 = int(second_pad)
    ks = int(kernel_size)
    C1 = params["conv1_w"].shape[-1]
    C2 = params["conv2_w"].shape[-1]
    NOFF = box_num * 4
    NCONF = box_num * class_num
    NH = NOFF + NCONF

    Ho = (H + 2 * pad2 - 3) // stride2 + 1
    Wo = (W + 2 * pad2 - 3) // stride2 + 1
    if H % stride2 or W % stride2 or Ho != H // stride2 or Wo != W // stride2:
        raise ValueError("fused ScaleMap kernel needs H, W divisible by "
                         "second_stride and output == input/stride "
                         "(holds for the module default second_pad=1).")
    if ks % 2 != 1:
        raise ValueError("head kernel_size must be odd ('same' padding).")
    M = Ho * Wo
    NPH = stride2 * stride2

    # ---- tap grouping (by horizontal shift qw) & halo sizes ------------------
    groups2, order2, max_off2 = _build_groups(3, stride2, pad2, Wo)
    groupsh, orderh, max_offh = _build_groups(ks, 1, ks // 2, Wo)
    PAD1 = ((max_off2 + 15) // 16) * 16 if max_off2 else 0
    PADH = ((max_offh + 15) // 16) * 16 if max_offh else 0

    # ---- operands: bf16 matmul inputs, f32 epilogue params -------------------
    x_nhwc = jnp.transpose(x_nchw, (0, 2, 3, 1)).astype(jnp.bfloat16)
    phases = [x_nhwc[:, a::stride2, b::stride2, :].reshape(B, M, C0)
              for a in range(stride2) for b in range(stride2)]
    xflat = jnp.concatenate(phases, axis=1)                      # (B, NPH*M, C0)

    w1 = params["conv1_w"].reshape(C0, C1).astype(jnp.bfloat16)
    # conv2 / head weights reordered so each qw-group is a contiguous row block
    w2g = params["conv2_w"].reshape(9, C1, C2)[np.array(order2)]
    w2g = w2g.reshape(9 * C1, C2).astype(jnp.bfloat16)
    wcat = jnp.concatenate([params["off_w"], params["conf_w"]], axis=-1)
    whg = wcat.reshape(ks * ks, C2, NH)[np.array(orderh)]
    whg = whg.reshape(ks * ks * C2, NH).astype(jnp.bfloat16)
    bh = jnp.concatenate([params["off_b"], params["conf_b"]])[None, :]
    bh = bh.astype(jnp.float32)                                   # (1, NH)

    s1, b1 = fold_conv_bn(params["conv1_b"], params["bn1"], norm)
    s2v, b2v = fold_conv_bn(params["conv2_b"], params["bn2"], norm)
    s1 = s1[None, :].astype(jnp.float32)
    b1 = b1[None, :].astype(jnp.float32)
    s2v = s2v[None, :].astype(jnp.float32)
    b2v = b2v[None, :].astype(jnp.float32)

    cfg = (NPH, M, PAD1, groups2, PADH, groupsh, Wo, C1, C2)
    kernel = _build_kernel(cfg)

    flops = 2 * B * (NPH * M * C0 * C1 + M * 9 * C1 * C2
                     + M * ks * ks * C2 * NH)
    bytes_accessed = int(xflat.size * 2 + w1.size * 2 + w2g.size * 2
                         + whg.size * 2
                         + (s1.size + b1.size + s2v.size + b2v.size
                            + bh.size) * 4
                         + B * M * (C2 + NH) * 4)

    out_shapes = (
        jax.ShapeDtypeStruct((B, M, C2), jnp.float32),   # feature map (NHWC flat)
        jax.ShapeDtypeStruct((B, NH, M), jnp.float32),   # fused heads, lane-dense
    )
    grid_spec = pltpu.PrefetchScalarGridSpec(
        num_scalar_prefetch=0,
        grid=(B,),
        in_specs=[
            pl.BlockSpec((1, NPH * M, C0), lambda i: (i, 0, 0)),
            pl.BlockSpec((C0, C1), lambda i: (0, 0)),
            pl.BlockSpec((1, C1), lambda i: (0, 0)),
            pl.BlockSpec((1, C1), lambda i: (0, 0)),
            pl.BlockSpec((9 * C1, C2), lambda i: (0, 0)),
            pl.BlockSpec((1, C2), lambda i: (0, 0)),
            pl.BlockSpec((1, C2), lambda i: (0, 0)),
            pl.BlockSpec((ks * ks * C2, NH), lambda i: (0, 0)),
            pl.BlockSpec((1, NH), lambda i: (0, 0)),
        ],
        out_specs=[
            pl.BlockSpec((1, M, C2), lambda i: (i, 0, 0)),
            pl.BlockSpec((1, NH, M), lambda i: (i, 0, 0)),
        ],
        scratch_shapes=[
            pltpu.VMEM((NPH, M + 2 * PAD1, C1), jnp.bfloat16),   # padded y1
            pltpu.VMEM((M + 2 * PADH, C2), jnp.bfloat16),        # padded y2
            pltpu.VMEM((M, C2), jnp.float32),                    # conv2 acc
            pltpu.VMEM((M, NH), jnp.float32),                    # head acc
        ],
    )
    ox, oh = pl.pallas_call(
        kernel,
        out_shape=out_shapes,
        grid_spec=grid_spec,
        compiler_params=pltpu.CompilerParams(
            dimension_semantics=("parallel",),
            vmem_limit_bytes=64 * 1024 * 1024),
        cost_estimate=pl.CostEstimate(flops=flops, transcendentals=0,
                                      bytes_accessed=bytes_accessed),
    )(xflat, w1, s1, b1, w2g, s2v, b2v, whg, bh)

    # feature map: channels-last -> NCHW (one tiny transpose); head slab is
    # channels-first already, so the PyTorch torch.reshape is a pure view.
    x_out = jnp.transpose(ox.reshape(B, Ho, Wo, C2), (0, 3, 1, 2))
    offset = oh[:, :NOFF, :].reshape(B, Ho * Wo * box_num, 4)
    confid = oh[:, NOFF:, :].reshape(B, Ho * Wo * box_num, class_num)
    return x_out, offset, confid


# ----------------------------------------------------------------------------
# Pure-JAX f32 reference (correctness sanity check)
# ----------------------------------------------------------------------------
def reference_forward(x_nchw, params, box_num, class_num, second_stride,
                      second_pad, kernel_size=3, norm=True, eps=1e-5):
    x = jnp.transpose(x_nchw, (0, 2, 3, 1)).astype(jnp.float32)

    def conv(h, w, stride, pad):
        return jax.lax.conv_general_dilated(
            h, w, (stride, stride), [(pad, pad), (pad, pad)],
            dimension_numbers=("NHWC", "HWIO", "NHWC"))

    def bn(h, p):
        return (h - p["mean"]) / jnp.sqrt(p["var"] + eps) * p["gamma"] + p["beta"]

    h = conv(x, params["conv1_w"], 1, 0) + params["conv1_b"]
    if norm:
        h = bn(h, params["bn1"])
    h = jax.nn.relu(h)
    h = conv(h, params["conv2_w"], second_stride, second_pad) + params["conv2_b"]
    if norm:
        h = bn(h, params["bn2"])
    h = jax.nn.relu(h)
    B, Ho, Wo, _ = h.shape
    off = conv(h, params["off_w"], 1, kernel_size // 2) + params["off_b"]
    conf = conv(h, params["conf_w"], 1, kernel_size // 2) + params["conf_b"]
    x_out = jnp.transpose(h, (0, 3, 1, 2))
    offset = jnp.transpose(off, (0, 3, 1, 2)).reshape(B, Ho * Wo * box_num, 4)
    confid = jnp.transpose(conf, (0, 3, 1, 2)).reshape(B, Ho * Wo * box_num,
                                                       class_num)
    return x_out, offset, confid


if __name__ == "__main__":
    channels = (4, 8, 16)
    box_num, class_num = 4, 3
    second_stride, second_pad = 2, 1

    key = jax.random.PRNGKey(0)
    kx, kp = jax.random.split(key)
    x = jax.random.normal(kx, (2, channels[0], 16, 16), jnp.float32)  # NCHW
    params = init_params(kp, channels, box_num, class_num)

    out = scale_map_forward(x, params, box_num, class_num,
                            second_stride, second_pad)
    out = jax.block_until_ready(out)

    ref = reference_forward(x, params, box_num, class_num,
                            second_stride, second_pad)
    # bf16 MXU operands / bf16-rounded y2 feeding the heads vs f32 reference.
    for got, want in zip(out, ref):
        np.testing.assert_allclose(np.asarray(got), np.asarray(want),
                                   rtol=2e-2, atol=2e-2)

    print("KERNEL_OK")
</pallas_src>

<mosaic_0001>
module attributes {stable_mosaic.version = 11 : i64} {
  func.func @kernel(%arg0: i32, %arg1: memref<1x256x4xbf16, #tpu.memory_space<vmem>>, %arg2: memref<4x8xbf16, #tpu.memory_space<vmem>>, %arg3: memref<1x8xf32, #tpu.memory_space<vmem>>, %arg4: memref<1x8xf32, #tpu.memory_space<vmem>>, %arg5: memref<72x16xbf16, #tpu.memory_space<vmem>>, %arg6: memref<1x16xf32, #tpu.memory_space<vmem>>, %arg7: memref<1x16xf32, #tpu.memory_space<vmem>>, %arg8: memref<144x28xbf16, #tpu.memory_space<vmem>>, %arg9: memref<1x28xf32, #tpu.memory_space<vmem>>, %arg10: memref<1x64x16xf32, #tpu.memory_space<vmem>>, %arg11: memref<1x28x64xf32, #tpu.memory_space<vmem>>, %arg12: memref<4x96x8xbf16, #tpu.memory_space<vmem>>, %arg13: memref<96x16xbf16, #tpu.memory_space<vmem>>, %arg14: memref<64x16xf32, #tpu.memory_space<vmem>>, %arg15: memref<64x28xf32, #tpu.memory_space<vmem>>) attributes {dimension_semantics = [#tpu.dimension_semantics<parallel>], iteration_bounds = array<i64: 2>, scalar_prefetch = 0 : i64, scratch_operands = 4 : i64, tpu.core_type = #tpu.core_type<tc>, window_params = [{transform_indices = @transform_0, window_bounds = array<i64: 1, 256, 4>}, {pipeline_mode = #tpu.pipeline_mode<synchronous>, transform_indices = @transform_1, window_bounds = array<i64: 4, 8>}, {pipeline_mode = #tpu.pipeline_mode<synchronous>, transform_indices = @transform_2, window_bounds = array<i64: 1, 8>}, {pipeline_mode = #tpu.pipeline_mode<synchronous>, transform_indices = @transform_3, window_bounds = array<i64: 1, 8>}, {pipeline_mode = #tpu.pipeline_mode<synchronous>, transform_indices = @transform_4, window_bounds = array<i64: 72, 16>}, {pipeline_mode = #tpu.pipeline_mode<synchronous>, transform_indices = @transform_5, window_bounds = array<i64: 1, 16>}, {pipeline_mode = #tpu.pipeline_mode<synchronous>, transform_indices = @transform_6, window_bounds = array<i64: 1, 16>}, {pipeline_mode = #tpu.pipeline_mode<synchronous>, transform_indices = @transform_7, window_bounds = array<i64: 144, 28>}, {pipeline_mode = #tpu.pipeline_mode<synchronous>, transform_indices = @transform_8, window_bounds = array<i64: 1, 28>}, {transform_indices = @transform_9, window_bounds = array<i64: 1, 64, 16>}, {transform_indices = @transform_10, window_bounds = array<i64: 1, 28, 64>}]} {
    %cst = arith.constant 0.000000e+00 : bf16
    %0 = vector.broadcast %cst : bf16 to vector<4x16x8xbf16>
    %c0 = arith.constant 0 : index
    %c0_0 = arith.constant 0 : index
    %c0_1 = arith.constant 0 : index
    %1 = vector.load %arg12[%c0, %c0_0, %c0_1] : memref<4x96x8xbf16, #tpu.memory_space<vmem>>, vector<4x16x8xbf16>
    tpu.vector_store %arg12[%c0, %c0_0, %c0_1], %0 {strides = array<i32>} : memref<4x96x8xbf16, #tpu.memory_space<vmem>>, vector<4x16x8xbf16>,
    %cst_2 = arith.constant 0.000000e+00 : bf16
    %2 = vector.broadcast %cst_2 : bf16 to vector<4x16x8xbf16>
    %c0_3 = arith.constant 0 : index
    %c80 = arith.constant 80 : index
    %c0_4 = arith.constant 0 : index
    %3 = vector.load %arg12[%c0_3, %c80, %c0_4] : memref<4x96x8xbf16, #tpu.memory_space<vmem>>, vector<4x16x8xbf16>
    tpu.vector_store %arg12[%c0_3, %c80, %c0_4], %2 {strides = array<i32>} : memref<4x96x8xbf16, #tpu.memory_space<vmem>>, vector<4x16x8xbf16>,
    %cst_5 = arith.constant 0.000000e+00 : bf16
    %4 = vector.broadcast %cst_5 : bf16 to vector<16x16xbf16>
    %c0_6 = arith.constant 0 : index
    %c0_7 = arith.constant 0 : index
    %5 = vector.load %arg13[%c0_6, %c0_7] : memref<96x16xbf16, #tpu.memory_space<vmem>>, vector<16x16xbf16>
    tpu.vector_store %arg13[%c0_6, %c0_7], %4 {strides = array<i32>} : memref<96x16xbf16, #tpu.memory_space<vmem>>, vector<16x16xbf16>,
    %cst_8 = arith.constant 0.000000e+00 : bf16
    %6 = vector.broadcast %cst_8 : bf16 to vector<16x16xbf16>
    %c80_9 = arith.constant 80 : index
    %c0_10 = arith.constant 0 : index
    %7 = vector.load %arg13[%c80_9, %c0_10] : memref<96x16xbf16, #tpu.memory_space<vmem>>, vector<16x16xbf16>
    tpu.vector_store %arg13[%c80_9, %c0_10], %6 {strides = array<i32>} : memref<96x16xbf16, #tpu.memory_space<vmem>>, vector<16x16xbf16>,
    %c0_11 = arith.constant 0 : index
    %c0_12 = arith.constant 0 : index
    %c0_13 = arith.constant 0 : index
    %8 = vector.load %arg1[%c0_11, %c0_12, %c0_13] : memref<1x256x4xbf16, #tpu.memory_space<vmem>>, vector<1x256x4xbf16>
    %9 = vector.shape_cast %8 : vector<1x256x4xbf16> to vector<256x4xbf16>
    %c0_14 = arith.constant 0 : index
    %c0_15 = arith.constant 0 : index
    %10 = vector.load %arg2[%c0_14, %c0_15] : memref<4x8xbf16, #tpu.memory_space<vmem>>, vector<4x8xbf16>
    %cst_16 = arith.constant dense<0.000000e+00> : vector<256x8xf32>
    %11 = tpu.matmul %9, %10, %cst_16 {dimension_numbers = #tpu.dot_dimension_numbers<[1], [0], [0], [1], [0, 0, 1, 1], [], []>} : vector<256x4xbf16>, vector<4x8xbf16>, vector<256x8xf32> -> vector<256x8xf32>
    %c0_17 = arith.constant 0 : index
    %c0_18 = arith.constant 0 : index
    %12 = vector.load %arg3[%c0_17, %c0_18] : memref<1x8xf32, #tpu.memory_space<vmem>>, vector<1x8xf32>
    %13 = vector.broadcast %12 : vector<1x8xf32> to vector<256x8xf32>
    %14 = arith.mulf %11, %13 : vector<256x8xf32>
    %c0_19 = arith.constant 0 : index
    %c0_20 = arith.constant 0 : index
    %15 = vector.load %arg4[%c0_19, %c0_20] : memref<1x8xf32, #tpu.memory_space<vmem>>, vector<1x8xf32>
    %16 = vector.broadcast %15 : vector<1x8xf32> to vector<256x8xf32>
    %17 = arith.addf %14, %16 : vector<256x8xf32>
    %cst_21 = arith.constant 0.000000e+00 : f32
    %18 = vector.broadcast %cst_21 : f32 to vector<256x8xf32>
    %19 = arith.maximumf %17, %18 : vector<256x8xf32>
    %20 = arith.truncf %19 : vector<256x8xf32> to vector<256x8xbf16>
    %21 = vector.extract_strided_slice %20 {offsets = [0, 0], sizes = [64, 8], strides = [1, 1]} : vector<256x8xbf16> to vector<64x8xbf16>
    %c0_22 = arith.constant 0 : index
    %c16 = arith.constant 16 : index
    %c0_23 = arith.constant 0 : index
    %22 = vector.load %arg12[%c0_22, %c16, %c0_23] : memref<4x96x8xbf16, #tpu.memory_space<vmem>>, vector<1x64x8xbf16>
    %23 = vector.shape_cast %22 : vector<1x64x8xbf16> to vector<64x8xbf16>
    %24 = vector.shape_cast %21 : vector<64x8xbf16> to vector<1x64x8xbf16>
    tpu.vector_store %arg12[%c0_22, %c16, %c0_23], %24 {strides = array<i32>} : memref<4x96x8xbf16, #tpu.memory_space<vmem>>, vector<1x64x8xbf16>,
    %25 = vector.extract_strided_slice %20 {offsets = [64, 0], sizes = [64, 8], strides = [1, 1]} : vector<256x8xbf16> to vector<64x8xbf16>
    %c1 = arith.constant 1 : index
    %c16_24 = arith.constant 16 : index
    %c0_25 = arith.constant 0 : index
    %26 = vector.load %arg12[%c1, %c16_24, %c0_25] : memref<4x96x8xbf16, #tpu.memory_space<vmem>>, vector<1x64x8xbf16>
    %27 = vector.shape_cast %26 : vector<1x64x8xbf16> to vector<64x8xbf16>
    %28 = vector.shape_cast %25 : vector<64x8xbf16> to vector<1x64x8xbf16>
    tpu.vector_store %arg12[%c1, %c16_24, %c0_25], %28 {strides = array<i32>} : memref<4x96x8xbf16, #tpu.memory_space<vmem>>, vector<1x64x8xbf16>,
    %29 = vector.extract_strided_slice %20 {offsets = [128, 0], sizes = [64, 8], strides = [1, 1]} : vector<256x8xbf16> to vector<64x8xbf16>
    %c2 = arith.constant 2 : index
    %c16_26 = arith.constant 16 : index
    %c0_27 = arith.constant 0 : index
    %30 = vector.load %arg12[%c2, %c16_26, %c0_27] : memref<4x96x8xbf16, #tpu.memory_space<vmem>>, vector<1x64x8xbf16>
    %31 = vector.shape_cast %30 : vector<1x64x8xbf16> to vector<64x8xbf16>
    %32 = vector.shape_cast %29 : vector<64x8xbf16> to vector<1x64x8xbf16>
    tpu.vector_store %arg12[%c2, %c16_26, %c0_27], %32 {strides = array<i32>} : memref<4x96x8xbf16, #tpu.memory_space<vmem>>, vector<1x64x8xbf16>,
    %33 = vector.extract_strided_slice %20 {offsets = [192, 0], sizes = [64, 8], strides = [1, 1]} : vector<256x8xbf16> to vector<64x8xbf16>
    %c3 = arith.constant 3 : index
    %c16_28 = arith.constant 16 : index
    %c0_29 = arith.constant 0 : index
    %34 = vector.load %arg12[%c3, %c16_28, %c0_29] : memref<4x96x8xbf16, #tpu.memory_space<vmem>>, vector<1x64x8xbf16>
    %35 = vector.shape_cast %34 : vector<1x64x8xbf16> to vector<64x8xbf16>
    %36 = vector.shape_cast %33 : vector<64x8xbf16> to vector<1x64x8xbf16>
    tpu.vector_store %arg12[%c3, %c16_28, %c0_29], %36 {strides = array<i32>} : memref<4x96x8xbf16, #tpu.memory_space<vmem>>, vector<1x64x8xbf16>,
    %37 = tpu.iota {dimensions = array<i32: 0>} : vector<64x1xi32>
    %c8_i32 = arith.constant 8 : i32
    %c0_i32 = arith.constant 0 : i32
    %38 = arith.cmpi eq, %c8_i32, %c0_i32 : i32
    %c1_i32 = arith.constant 1 : i32
    %39 = arith.select %38, %c1_i32, %c8_i32 : i32
    %40 = vector.broadcast %39 : i32 to vector<64x1xi32>
    %41 = arith.remsi %37, %40 : vector<64x1xi32>
    %c0_i32_30 = arith.constant 0 : i32
    %42 = vector.broadcast %c0_i32_30 : i32 to vector<64x1xi32>
    %43 = arith.cmpi ne, %41, %42 : vector<64x1xi32>
    %c0_i32_31 = arith.constant 0 : i32
    %44 = vector.broadcast %c0_i32_31 : i32 to vector<64x1xi32>
    %45 = arith.cmpi slt, %41, %44 : vector<64x1xi32>
    %c0_i32_32 = arith.constant 0 : i32
    %46 = arith.cmpi slt, %39, %c0_i32_32 : i32
    %47 = vector.broadcast %46 : i1 to vector<64x1xi1>
    %48 = vector.broadcast %47 : vector<64x1xi1> to vector<64x1xi1>
    %49 = arith.xori %45, %48 : vector<64x1xi1>
    %50 = arith.andi %49, %43 : vector<64x1xi1>
    %51 = vector.broadcast %39 : i32 to vector<64x1xi32>
    %52 = arith.addi %41, %51 : vector<64x1xi32>
    %53 = arith.select %50, %52, %41 : vector<64x1xi1>, vector<64x1xi32>
    %c-1_i32 = arith.constant -1 : i32
    %54 = vector.broadcast %c-1_i32 : i32 to vector<64x1xi32>
    %55 = arith.addi %53, %54 : vector<64x1xi32>
    %c0_i32_33 = arith.constant 0 : i32
    %56 = vector.broadcast %c0_i32_33 : i32 to vector<64x1xi32>
    %57 = arith.cmpi sge, %55, %56 : vector<64x1xi32>
    %c-1_i32_34 = arith.constant -1 : i32
    %58 = vector.broadcast %c-1_i32_34 : i32 to vector<64x1xi32>
    %59 = arith.addi %53, %58 : vector<64x1xi32>
    %c8_i32_35 = arith.constant 8 : i32
    %60 = vector.broadcast %c8_i32_35 : i32 to vector<64x1xi32>
    %61 = arith.cmpi slt, %59, %60 : vector<64x1xi32>
    %62 = arith.andi %57, %61 : vector<64x1xi1>
    %63 = arith.extui %62 : vector<64x1xi1> to vector<64x1xi32>
    %64 = arith.sitofp %63 : vector<64x1xi32> to vector<64x1xf32>
    %c1_i32_36 = arith.constant 1 : i32
    %65 = vector.broadcast %c1_i32_36 : i32 to vector<64x1xi32>
    %66 = arith.addi %53, %65 : vector<64x1xi32>
    %c0_i32_37 = arith.constant 0 : i32
    %67 = vector.broadcast %c0_i32_37 : i32 to vector<64x1xi32>
    %68 = arith.cmpi sge, %66, %67 : vector<64x1xi32>
    %c1_i32_38 = arith.constant 1 : i32
    %69 = vector.broadcast %c1_i32_38 : i32 to vector<64x1xi32>
    %70 = arith.addi %53, %69 : vector<64x1xi32>
    %c8_i32_39 = arith.constant 8 : i32
    %71 = vector.broadcast %c8_i32_39 : i32 to vector<64x1xi32>
    %72 = arith.cmpi slt, %70, %71 : vector<64x1xi32>
    %73 = arith.andi %68, %72 : vector<64x1xi1>
    %74 = arith.extui %73 : vector<64x1xi1> to vector<64x1xi32>
    %75 = arith.sitofp %74 : vector<64x1xi32> to vector<64x1xf32>
    %c3_40 = arith.constant 3 : index
    %c7 = arith.constant 7 : index
    %c0_41 = arith.constant 0 : index
    %76 = vector.load %arg12[%c3_40, %c7, %c0_41] : memref<4x96x8xbf16, #tpu.memory_space<vmem>>, vector<1x64x8xbf16>
    %77 = vector.shape_cast %76 : vector<1x64x8xbf16> to vector<64x8xbf16>
    %c1_42 = arith.constant 1 : index
    %c15 = arith.constant 15 : index
    %c0_43 = arith.constant 0 : index
    %78 = vector.load %arg12[%c1_42, %c15, %c0_43] : memref<4x96x8xbf16, #tpu.memory_space<vmem>>, vector<1x64x8xbf16>
    %79 = vector.shape_cast %78 : vector<1x64x8xbf16> to vector<64x8xbf16>
    %c3_44 = arith.constant 3 : index
    %c15_45 = arith.constant 15 : index
    %c0_46 = arith.constant 0 : index
    %80 = vector.load %arg12[%c3_44, %c15_45, %c0_46] : memref<4x96x8xbf16, #tpu.memory_space<vmem>>, vector<1x64x8xbf16>
    %81 = vector.shape_cast %80 : vector<1x64x8xbf16> to vector<64x8xbf16>
    %82 = tpu.concatenate %77, %79, %81 in 1 : vector<64x8xbf16>, vector<64x8xbf16>, vector<64x8xbf16> -> vector<64x24xbf16>
    %c0_47 = arith.constant 0 : index
    %c0_48 = arith.constant 0 : index
    %83 = vector.load %arg5[%c0_47, %c0_48] : memref<72x16xbf16, #tpu.memory_space<vmem>>, vector<24x16xbf16>
    %cst_49 = arith.constant dense<0.000000e+00> : vector<64x16xf32>
    %84 = tpu.matmul %82, %83, %cst_49 {dimension_numbers = #tpu.dot_dimension_numbers<[1], [0], [0], [1], [0, 0, 1, 1], [], []>} : vector<64x24xbf16>, vector<24x16xbf16>, vector<64x16xf32> -> vector<64x16xf32>
    %85 = vector.broadcast %64 : vector<64x1xf32> to vector<64x16xf32>
    %86 = arith.mulf %84, %85 : vector<64x16xf32>
    %c0_50 = arith.constant 0 : index
    %c0_51 = arith.constant 0 : index
    %87 = vector.load %arg14[%c0_50, %c0_51] : memref<64x16xf32, #tpu.memory_space<vmem>>, vector<64x16xf32>
    tpu.vector_store %arg14[%c0_50, %c0_51], %86 {strides = array<i32>} : memref<64x16xf32, #tpu.memory_space<vmem>>, vector<64x16xf32>,
    %c2_52 = arith.constant 2 : index
    %c8 = arith.constant 8 : index
    %c0_53 = arith.constant 0 : index
    %88 = vector.load %arg12[%c2_52, %c8, %c0_53] : memref<4x96x8xbf16, #tpu.memory_space<vmem>>, vector<1x64x8xbf16>
    %89 = vector.shape_cast %88 : vector<1x64x8xbf16> to vector<64x8xbf16>
    %c3_54 = arith.constant 3 : index
    %c8_55 = arith.constant 8 : index
    %c0_56 = arith.constant 0 : index
    %90 = vector.load %arg12[%c3_54, %c8_55, %c0_56] : memref<4x96x8xbf16, #tpu.memory_space<vmem>>, vector<1x64x8xbf16>
    %91 = vector.shape_cast %90 : vector<1x64x8xbf16> to vector<64x8xbf16>
    %c0_57 = arith.constant 0 : index
    %c16_58 = arith.constant 16 : index
    %c0_59 = arith.constant 0 : index
    %92 = vector.load %arg12[%c0_57, %c16_58, %c0_59] : memref<4x96x8xbf16, #tpu.memory_space<vmem>>, vector<1x64x8xbf16>
    %93 = vector.shape_cast %92 : vector<1x64x8xbf16> to vector<64x8xbf16>
    %c1_60 = arith.constant 1 : index
    %c16_61 = arith.constant 16 : index
    %c0_62 = arith.constant 0 : index
    %94 = vector.load %arg12[%c1_60, %c16_61, %c0_62] : memref<4x96x8xbf16, #tpu.memory_space<vmem>>, vector<1x64x8xbf16>
    %95 = vector.shape_cast %94 : vector<1x64x8xbf16> to vector<64x8xbf16>
    %c2_63 = arith.constant 2 : index
    %c16_64 = arith.constant 16 : index
    %c0_65 = arith.constant 0 : index
    %96 = vector.load %arg12[%c2_63, %c16_64, %c0_65] : memref<4x96x8xbf16, #tpu.memory_space<vmem>>, vector<1x64x8xbf16>
    %97 = vector.shape_cast %96 : vector<1x64x8xbf16> to vector<64x8xbf16>
    %c3_66 = arith.constant 3 : index
    %c16_67 = arith.constant 16 : index
    %c0_68 = arith.constant 0 : index
    %98 = vector.load %arg12[%c3_66, %c16_67, %c0_68] : memref<4x96x8xbf16, #tpu.memory_space<vmem>>, vector<1x64x8xbf16>
    %99 = vector.shape_cast %98 : vector<1x64x8xbf16> to vector<64x8xbf16>
    %100 = tpu.concatenate %89, %91, %93, %95, %97, %99 in 1 : vector<64x8xbf16>, vector<64x8xbf16>, vector<64x8xbf16>, vector<64x8xbf16>, vector<64x8xbf16>, vector<64x8xbf16> -> vector<64x48xbf16>
    %c24 = arith.constant 24 : index
    %c0_69 = arith.constant 0 : index
    %101 = vector.load %arg5[%c24, %c0_69] : memref<72x16xbf16, #tpu.memory_space<vmem>>, vector<48x16xbf16>
    %cst_70 = arith.constant dense<0.000000e+00> : vector<64x16xf32>
    %102 = tpu.matmul %100, %101, %cst_70 {dimension_numbers = #tpu.dot_dimension_numbers<[1], [0], [0], [1], [0, 0, 1, 1], [], []>} : vector<64x48xbf16>, vector<48x16xbf16>, vector<64x16xf32> -> vector<64x16xf32>
    %c0_71 = arith.constant 0 : index
    %c0_72 = arith.constant 0 : index
    %103 = vector.load %arg14[%c0_71, %c0_72] : memref<64x16xf32, #tpu.memory_space<vmem>>, vector<64x16xf32>
    %104 = arith.addf %103, %102 : vector<64x16xf32>
    %c0_73 = arith.constant 0 : index
    %c0_74 = arith.constant 0 : index
    %105 = vector.load %arg14[%c0_73, %c0_74] : memref<64x16xf32, #tpu.memory_space<vmem>>, vector<64x16xf32>
    tpu.vector_store %arg14[%c0_73, %c0_74], %104 {strides = array<i32>} : memref<64x16xf32, #tpu.memory_space<vmem>>, vector<64x16xf32>,
    %c0_75 = arith.constant 0 : index
    %c0_76 = arith.constant 0 : index
    %106 = vector.load %arg14[%c0_75, %c0_76] : memref<64x16xf32, #tpu.memory_space<vmem>>, vector<64x16xf32>
    %c0_77 = arith.constant 0 : index
    %c0_78 = arith.constant 0 : index
    %107 = vector.load %arg6[%c0_77, %c0_78] : memref<1x16xf32, #tpu.memory_space<vmem>>, vector<1x16xf32>
    %108 = vector.broadcast %107 : vector<1x16xf32> to vector<64x16xf32>
    %109 = arith.mulf %106, %108 : vector<64x16xf32>
    %c0_79 = arith.constant 0 : index
    %c0_80 = arith.constant 0 : index
    %110 = vector.load %arg7[%c0_79, %c0_80] : memref<1x16xf32, #tpu.memory_space<vmem>>, vector<1x16xf32>
    %111 = vector.broadcast %110 : vector<1x16xf32> to vector<64x16xf32>
    %112 = arith.addf %109, %111 : vector<64x16xf32>
    %cst_81 = arith.constant 0.000000e+00 : f32
    %113 = vector.broadcast %cst_81 : f32 to vector<64x16xf32>
    %114 = arith.maximumf %112, %113 : vector<64x16xf32>
    %c0_82 = arith.constant 0 : index
    %c0_83 = arith.constant 0 : index
    %c0_84 = arith.constant 0 : index
    %115 = vector.load %arg10[%c0_82, %c0_83, %c0_84] : memref<1x64x16xf32, #tpu.memory_space<vmem>>, vector<1x64x16xf32>
    %116 = vector.shape_cast %115 : vector<1x64x16xf32> to vector<64x16xf32>
    %117 = vector.shape_cast %114 : vector<64x16xf32> to vector<1x64x16xf32>
    tpu.vector_store %arg10[%c0_82, %c0_83, %c0_84], %117 {strides = array<i32>} : memref<1x64x16xf32, #tpu.memory_space<vmem>>, vector<1x64x16xf32>,
    %118 = arith.truncf %114 : vector<64x16xf32> to vector<64x16xbf16>
    %c16_85 = arith.constant 16 : index
    %c0_86 = arith.constant 0 : index
    %119 = vector.load %arg13[%c16_85, %c0_86] : memref<96x16xbf16, #tpu.memory_space<vmem>>, vector<64x16xbf16>
    tpu.vector_store %arg13[%c16_85, %c0_86], %118 {strides = array<i32>} : memref<96x16xbf16, #tpu.memory_space<vmem>>, vector<64x16xbf16>,
    %c7_87 = arith.constant 7 : index
    %c0_88 = arith.constant 0 : index
    %120 = vector.load %arg13[%c7_87, %c0_88] : memref<96x16xbf16, #tpu.memory_space<vmem>>, vector<64x16xbf16>
    %c15_89 = arith.constant 15 : index
    %c0_90 = arith.constant 0 : index
    %121 = vector.load %arg13[%c15_89, %c0_90] : memref<96x16xbf16, #tpu.memory_space<vmem>>, vector<64x16xbf16>
    %c23 = arith.constant 23 : index
    %c0_91 = arith.constant 0 : index
    %122 = vector.load %arg13[%c23, %c0_91] : memref<96x16xbf16, #tpu.memory_space<vmem>>, vector<64x16xbf16>
    %123 = tpu.concatenate %120, %121, %122 in 1 : vector<64x16xbf16>, vector<64x16xbf16>, vector<64x16xbf16> -> vector<64x48xbf16>
    %c0_92 = arith.constant 0 : index
    %c0_93 = arith.constant 0 : index
    %124 = vector.load %arg8[%c0_92, %c0_93] : memref<144x28xbf16, #tpu.memory_space<vmem>>, vector<48x28xbf16>
    %cst_94 = arith.constant dense<0.000000e+00> : vector<64x28xf32>
    %125 = tpu.matmul %123, %124, %cst_94 {dimension_numbers = #tpu.dot_dimension_numbers<[1], [0], [0], [1], [0, 0, 1, 1], [], []>} : vector<64x48xbf16>, vector<48x28xbf16>, vector<64x28xf32> -> vector<64x28xf32>
    %126 = vector.broadcast %64 : vector<64x1xf32> to vector<64x28xf32>
    %127 = arith.mulf %125, %126 : vector<64x28xf32>
    %c0_95 = arith.constant 0 : index
    %c0_96 = arith.constant 0 : index
    %128 = vector.load %arg15[%c0_95, %c0_96] : memref<64x28xf32, #tpu.memory_space<vmem>>, vector<64x28xf32>
    tpu.vector_store %arg15[%c0_95, %c0_96], %127 {strides = array<i32>} : memref<64x28xf32, #tpu.memory_space<vmem>>, vector<64x28xf32>,
    %c8_97 = arith.constant 8 : index
    %c0_98 = arith.constant 0 : index
    %129 = vector.load %arg13[%c8_97, %c0_98] : memref<96x16xbf16, #tpu.memory_space<vmem>>, vector<64x16xbf16>
    %c16_99 = arith.constant 16 : index
    %c0_100 = arith.constant 0 : index
    %130 = vector.load %arg13[%c16_99, %c0_100] : memref<96x16xbf16, #tpu.memory_space<vmem>>, vector<64x16xbf16>
    %c24_101 = arith.constant 24 : index
    %c0_102 = arith.constant 0 : index
    %131 = vector.load %arg13[%c24_101, %c0_102] : memref<96x16xbf16, #tpu.memory_space<vmem>>, vector<64x16xbf16>
    %132 = tpu.concatenate %129, %130, %131 in 1 : vector<64x16xbf16>, vector<64x16xbf16>, vector<64x16xbf16> -> vector<64x48xbf16>
    %c48 = arith.constant 48 : index
    %c0_103 = arith.constant 0 : index
    %133 = vector.load %arg8[%c48, %c0_103] : memref<144x28xbf16, #tpu.memory_space<vmem>>, vector<48x28xbf16>
    %cst_104 = arith.constant dense<0.000000e+00> : vector<64x28xf32>
    %134 = tpu.matmul %132, %133, %cst_104 {dimension_numbers = #tpu.dot_dimension_numbers<[1], [0], [0], [1], [0, 0, 1, 1], [], []>} : vector<64x48xbf16>, vector<48x28xbf16>, vector<64x28xf32> -> vector<64x28xf32>
    %c0_105 = arith.constant 0 : index
    %c0_106 = arith.constant 0 : index
    %135 = vector.load %arg15[%c0_105, %c0_106] : memref<64x28xf32, #tpu.memory_space<vmem>>, vector<64x28xf32>
    %136 = arith.addf %135, %134 : vector<64x28xf32>
    %c0_107 = arith.constant 0 : index
    %c0_108 = arith.constant 0 : index
    %137 = vector.load %arg15[%c0_107, %c0_108] : memref<64x28xf32, #tpu.memory_space<vmem>>, vector<64x28xf32>
    tpu.vector_store %arg15[%c0_107, %c0_108], %136 {strides = array<i32>} : memref<64x28xf32, #tpu.memory_space<vmem>>, vector<64x28xf32>,
    %c9 = arith.constant 9 : index
    %c0_109 = arith.constant 0 : index
    %138 = vector.load %arg13[%c9, %c0_109] : memref<96x16xbf16, #tpu.memory_space<vmem>>, vector<64x16xbf16>
    %c17 = arith.constant 17 : index
    %c0_110 = arith.constant 0 : index
    %139 = vector.load %arg13[%c17, %c0_110] : memref<96x16xbf16, #tpu.memory_space<vmem>>, vector<64x16xbf16>
    %c25 = arith.constant 25 : index
    %c0_111 = arith.constant 0 : index
    %140 = vector.load %arg13[%c25, %c0_111] : memref<96x16xbf16, #tpu.memory_space<vmem>>, vector<64x16xbf16>
    %141 = tpu.concatenate %138, %139, %140 in 1 : vector<64x16xbf16>, vector<64x16xbf16>, vector<64x16xbf16> -> vector<64x48xbf16>
    %c96 = arith.constant 96 : index
    %c0_112 = arith.constant 0 : index
    %142 = vector.load %arg8[%c96, %c0_112] : memref<144x28xbf16, #tpu.memory_space<vmem>>, vector<48x28xbf16>
    %cst_113 = arith.constant dense<0.000000e+00> : vector<64x28xf32>
    %143 = tpu.matmul %141, %142, %cst_113 {dimension_numbers = #tpu.dot_dimension_numbers<[1], [0], [0], [1], [0, 0, 1, 1], [], []>} : vector<64x48xbf16>, vector<48x28xbf16>, vector<64x28xf32> -> vector<64x28xf32>
    %144 = vector.broadcast %75 : vector<64x1xf32> to vector<64x28xf32>
    %145 = arith.mulf %143, %144 : vector<64x28xf32>
    %c0_114 = arith.constant 0 : index
    %c0_115 = arith.constant 0 : index
    %146 = vector.load %arg15[%c0_114, %c0_115] : memref<64x28xf32, #tpu.memory_space<vmem>>, vector<64x28xf32>
    %147 = arith.addf %146, %145 : vector<64x28xf32>
    %c0_116 = arith.constant 0 : index
    %c0_117 = arith.constant 0 : index
    %148 = vector.load %arg15[%c0_116, %c0_117] : memref<64x28xf32, #tpu.memory_space<vmem>>, vector<64x28xf32>
    tpu.vector_store %arg15[%c0_116, %c0_117], %147 {strides = array<i32>} : memref<64x28xf32, #tpu.memory_space<vmem>>, vector<64x28xf32>,
    %c0_118 = arith.constant 0 : index
    %c0_119 = arith.constant 0 : index
    %149 = vector.load %arg15[%c0_118, %c0_119] : memref<64x28xf32, #tpu.memory_space<vmem>>, vector<64x28xf32>
    %c0_120 = arith.constant 0 : index
    %c0_121 = arith.constant 0 : index
    %150 = vector.load %arg9[%c0_120, %c0_121] : memref<1x28xf32, #tpu.memory_space<vmem>>, vector<1x28xf32>
    %151 = vector.broadcast %150 : vector<1x28xf32> to vector<64x28xf32>
    %152 = arith.addf %149, %151 : vector<64x28xf32>
    %153 = tpu.transpose %152, [1, 0] : vector<64x28xf32> -> vector<28x64xf32>
    %c0_122 = arith.constant 0 : index
    %c0_123 = arith.constant 0 : index
    %c0_124 = arith.constant 0 : index
    %154 = vector.load %arg11[%c0_122, %c0_123, %c0_124] : memref<1x28x64xf32, #tpu.memory_space<vmem>>, vector<1x28x64xf32>
    %155 = vector.shape_cast %154 : vector<1x28x64xf32> to vector<28x64xf32>
    %156 = vector.shape_cast %153 : vector<28x64xf32> to vector<1x28x64xf32>
    tpu.vector_store %arg11[%c0_122, %c0_123, %c0_124], %156 {strides = array<i32>} : memref<1x28x64xf32, #tpu.memory_space<vmem>>, vector<1x28x64xf32>,
    return
  }
  func.func @transform_0(%arg0: i32) -> (i32, i32, i32) {
    %c0_i32 = arith.constant 0 : i32
    %c0_i32_0 = arith.constant 0 : i32
    %c0_i32_1 = arith.constant 0 : i32
    return %arg0, %c0_i32, %c0_i32_0 : i32, i32, i32
  }
  func.func @transform_1(%arg0: i32) -> (i32, i32) {
    %c0_i32 = arith.constant 0 : i32
    %c0_i32_0 = arith.constant 0 : i32
    %c0_i32_1 = arith.constant 0 : i32
    return %c0_i32, %c0_i32_0 : i32, i32
  }
  func.func @transform_2(%arg0: i32) -> (i32, i32) {
    %c0_i32 = arith.constant 0 : i32
    %c0_i32_0 = arith.constant 0 : i32
    %c0_i32_1 = arith.constant 0 : i32
    return %c0_i32, %c0_i32_0 : i32, i32
  }
  func.func @transform_3(%arg0: i32) -> (i32, i32) {
    %c0_i32 = arith.constant 0 : i32
    %c0_i32_0 = arith.constant 0 : i32
    %c0_i32_1 = arith.constant 0 : i32
    return %c0_i32, %c0_i32_0 : i32, i32
  }
  func.func @transform_4(%arg0: i32) -> (i32, i32) {
    %c0_i32 = arith.constant 0 : i32
    %c0_i32_0 = arith.constant 0 : i32
    %c0_i32_1 = arith.constant 0 : i32
    return %c0_i32, %c0_i32_0 : i32, i32
  }
  func.func @transform_5(%arg0: i32) -> (i32, i32) {
    %c0_i32 = arith.constant 0 : i32
    %c0_i32_0 = arith.constant 0 : i32
    %c0_i32_1 = arith.constant 0 : i32
    return %c0_i32, %c0_i32_0 : i32, i32
  }
  func.func @transform_6(%arg0: i32) -> (i32, i32) {
    %c0_i32 = arith.constant 0 : i32
    %c0_i32_0 = arith.constant 0 : i32
    %c0_i32_1 = arith.constant 0 : i32
    return %c0_i32, %c0_i32_0 : i32, i32
  }
  func.func @transform_7(%arg0: i32) -> (i32, i32) {
    %c0_i32 = arith.constant 0 : i32
    %c0_i32_0 = arith.constant 0 : i32
    %c0_i32_1 = arith.constant 0 : i32
    return %c0_i32, %c0_i32_0 : i32, i32
  }
  func.func @transform_8(%arg0: i32) -> (i32, i32) {
    %c0_i32 = arith.constant 0 : i32
    %c0_i32_0 = arith.constant 0 : i32
    %c0_i32_1 = arith.constant 0 : i32
    return %c0_i32, %c0_i32_0 : i32, i32
  }
  func.func @transform_9(%arg0: i32) -> (i32, i32, i32) {
    %c0_i32 = arith.constant 0 : i32
    %c0_i32_0 = arith.constant 0 : i32
    %c0_i32_1 = arith.constant 0 : i32
    return %arg0, %c0_i32, %c0_i32_0 : i32, i32, i32
  }
  func.func @transform_10(%arg0: i32) -> (i32, i32, i32) {
    %c0_i32 = arith.constant 0 : i32
    %c0_i32_0 = arith.constant 0 : i32
    %c0_i32_1 = arith.constant 0 : i32
    return %arg0, %c0_i32, %c0_i32_0 : i32, i32, i32
  }
}

</mosaic_0001>

<llo_original>
// kernel: tpu_custom_call.1
$region0: #{tpu_custom_call.1}
  #allocation0 [shape = 'u32[]', space=smem, size = 0x4, offset = 0x4, fixed_abs, tag = 'smem constant byte address 0x4 - core index']
  #allocation1 [shape = 'u32[144,128]{1,0:T(1,128)}', space=vmem, size = 0x12000, scoped, tag = 'internal scratch']
  #allocation2 [shape = 'bf16[4,96,8]{2,1,0:T(8,128)(2,1)}', space=vmem, size = 0x18000, scoped, tag = 'scratch operand']
  #allocation3 [shape = 'bf16[96,16]{1,0:T(8,128)(2,1)}', space=vmem, size = 0x6000, scoped, tag = 'scratch operand']
  #allocation4 [shape = 'f32[64,16]{1,0:T(8,128)}', space=vmem, size = 0x8000, scoped, tag = 'scratch operand']
  #allocation5 [shape = 'f32[64,28]{1,0:T(8,128)}', space=vmem, size = 0x8000, scoped, tag = 'scratch operand']
  %s0 = inlined_call_operand.vmem [shape: bf16[2,256,4], index: 0, kind: input, shape index: {}]
  %s1 = inlined_call_operand.vmem [shape: bf16[4,8], index: 1, kind: input, shape index: {}]
  %s2 = inlined_call_operand.vmem [shape: f32[1,8], index: 2, kind: input, shape index: {}]
  %s3 = inlined_call_operand.vmem [shape: f32[1,8], index: 3, kind: input, shape index: {}]
  %s4 = inlined_call_operand.vmem [shape: bf16[72,16], index: 4, kind: input, shape index: {}]
  %s5 = inlined_call_operand.vmem [shape: f32[1,16], index: 5, kind: input, shape index: {}]
  %s6 = inlined_call_operand.vmem [shape: f32[1,16], index: 6, kind: input, shape index: {}]
  %s7 = inlined_call_operand.vmem [shape: bf16[144,28], index: 7, kind: input, shape index: {}]
  %s8 = inlined_call_operand.vmem [shape: f32[1,28], index: 8, kind: input, shape index: {}]
  %s9 = inlined_call_operand.vmem [shape: f32[2,64,16], index: 9, kind: output, shape index: {0}]
  %s10 = inlined_call_operand.vmem [shape: f32[2,28,64], index: 10, kind: output, shape index: {1}]
  %11 = xla_tuple %s9, %s10
  %s12 = sld [smem:[#allocation0]]
  $region77: #{tpu_custom_call.1} parent=0
    _
  %s14 = ssub.s32 1, %s12
  %s15 = scalar_select 0, %s14, %s12
  loop: start=0, step=1, limit=4
  $region2: #{tpu_custom_call.1} parent=0 // loop_pre_header
    _
  $region3: #{tpu_custom_call.1} parent=0 // loop_header
    %s17 = sphi 0, %s21
    %p18 = scmp.ge.s32.totalorder %s17, 4
    %s27 = sphi 0, %s29
    %s30 = sphi 0, %s27
    %s31 = sphi 0, %s30
    %s47 = sphi 0, %s31
    %s51 = sphi 0, %s51
    %s53 = sphi 0, %s51
    %s54 = sphi 0, %s53
    %s68 = sphi 0, %s54
    %s72 = sphi 0, %s72
    %s74 = sphi 0, %s72
    %s75 = sphi 0, %s74
    %s89 = sphi 0, %s75
    %s93 = sphi 0, %s93
    %s95 = sphi 0, %s93
    %s96 = sphi 0, %s95
    %s110 = sphi 0, %s96
    %s114 = sphi 0, %s114
    %s116 = sphi 0, %s114
    %s117 = sphi 0, %s116
    %s131 = sphi 0, %s117
    %s135 = sphi 0, %s135
    %s137 = sphi 0, %s135
    %s138 = sphi 0, %s137
    %s152 = sphi 0, %s138
    %s156 = sphi 0, %s156
    %s158 = sphi 0, %s156
    %s159 = sphi 0, %s158
    %s173 = sphi 0, %s159
    %s177 = sphi 0, %s177
    %s179 = sphi 0, %s177
    %s180 = sphi 0, %s179
    %s194 = sphi 0, %s180
    %s198 = sphi 0, %s198
    %s200 = sphi 0, %s198
    %s201 = sphi 0, %s200
    %s215 = sphi 0, %s201
    %s221 = sphi 0, %s223
    %s224 = sphi 0, %s221
    %s225 = sphi 0, %s224
    %s241 = sphi 0, %s225
    %s247 = sphi 0, %s249
    %s250 = sphi 0, %s247
    %s251 = sphi 0, %s250
    %s267 = sphi 0, %s251
  $region4: #{tpu_custom_call.1} parent=0 // loop_header_branch
    %20 = sbr.rel (%p18) target = $region8
  $region5: #{tpu_custom_call.1} parent=0 // loop_body
    %s22 = ssub.s32 %s17, 1
    %s23 = ssub.s32 %s17, 2
    %s24 = sadd.s32 %s17, 1
    %s25 = ssub.s32 %s17, %s24
    %p26 = scmp.eq.s32.totalorder %s25, 0
    %s28 = sadd.s32 %s27, 1
    %s29 = scalar_select %p26, %s27, %s28
    %p32 = pneg %p26
    %p33 = scmp.eq.s32.totalorder %s17, 1
    %p34 = por %p32, %p33
    %p35 = scmp.ne.s32.totalorder %s27, %s30
    %p36 = scmp.eq.s32.totalorder %s17, 0
    %p37 = por %p35, %p36
    %p38 = scmp.ne.s32.totalorder %s27, %s30
    %p39 = scmp.eq.s32.totalorder %s22, 1
    %p40 = por %p38, %p39
    %p41 = scmp.ne.s32.totalorder %s30, %s31
    %p42 = scmp.eq.s32.totalorder %s22, 0
    %p43 = por %p41, %p42
    %p44 = scmp.ne.s32.totalorder %s30, %s31
    %p45 = scmp.eq.s32.totalorder %s23, 1
    %p46 = por %p44, %p45
    %p48 = scmp.ne.s32.totalorder %s31, %s47
    %p49 = scmp.eq.s32.totalorder %s23, 0
    %p50 = por %p48, %p49
    %s52 = sadd.s32 %s51, 1
    %p55 = scmp.eq.s32.totalorder %s17, 1
    %p56 = scmp.ne.s32.totalorder %s51, %s53
    %p57 = scmp.eq.s32.totalorder %s17, 0
    %p58 = por %p56, %p57
    %p59 = scmp.ne.s32.totalorder %s51, %s53
    %p60 = scmp.eq.s32.totalorder %s22, 1
    %p61 = por %p59, %p60
    %p62 = scmp.ne.s32.totalorder %s53, %s54
    %p63 = scmp.eq.s32.totalorder %s22, 0
    %p64 = por %p62, %p63
    %p65 = scmp.ne.s32.totalorder %s53, %s54
    %p66 = scmp.eq.s32.totalorder %s23, 1
    %p67 = por %p65, %p66
    %p69 = scmp.ne.s32.totalorder %s54, %s68
    %p70 = scmp.eq.s32.totalorder %s23, 0
    %p71 = por %p69, %p70
    %s73 = sadd.s32 %s72, 1
    %p76 = scmp.eq.s32.totalorder %s17, 1
    %p77 = scmp.ne.s32.totalorder %s72, %s74
    %p78 = scmp.eq.s32.totalorder %s17, 0
    %p79 = por %p77, %p78
    %p80 = scmp.ne.s32.totalorder %s72, %s74
    %p81 = scmp.eq.s32.totalorder %s22, 1
    %p82 = por %p80, %p81
    %p83 = scmp.ne.s32.totalorder %s74, %s75
    %p84 = scmp.eq.s32.totalorder %s22, 0
    %p85 = por %p83, %p84
    %p86 = scmp.ne.s32.totalorder %s74, %s75
    %p87 = scmp.eq.s32.totalorder %s23, 1
    %p88 = por %p86, %p87
    %p90 = scmp.ne.s32.totalorder %s75, %s89
    %p91 = scmp.eq.s32.totalorder %s23, 0
    %p92 = por %p90, %p91
    %s94 = sadd.s32 %s93, 1
    %p97 = scmp.eq.s32.totalorder %s17, 1
    %p98 = scmp.ne.s32.totalorder %s93, %s95
    %p99 = scmp.eq.s32.totalorder %s17, 0
    %p100 = por %p98, %p99
    %p101 = scmp.ne.s32.totalorder %s93, %s95
    %p102 = scmp.eq.s32.totalorder %s22, 1
    %p103 = por %p101, %p102
    %p104 = scmp.ne.s32.totalorder %s95, %s96
    %p105 = scmp.eq.s32.totalorder %s22, 0
    %p106 = por %p104, %p105
    %p107 = scmp.ne.s32.totalorder %s95, %s96
    %p108 = scmp.eq.s32.totalorder %s23, 1
    %p109 = por %p107, %p108
    %p111 = scmp.ne.s32.totalorder %s96, %s110
    %p112 = scmp.eq.s32.totalorder %s23, 0
    %p113 = por %p111, %p112
    %s115 = sadd.s32 %s114, 1
    %p118 = scmp.eq.s32.totalorder %s17, 1
    %p119 = scmp.ne.s32.totalorder %s114, %s116
    %p120 = scmp.eq.s32.totalorder %s17, 0
    %p121 = por %p119, %p120
    %p122 = scmp.ne.s32.totalorder %s114, %s116
    %p123 = scmp.eq.s32.totalorder %s22, 1
    %p124 = por %p122, %p123
    %p125 = scmp.ne.s32.totalorder %s116, %s117
    %p126 = scmp.eq.s32.totalorder %s22, 0
    %p127 = por %p125, %p126
    %p128 = scmp.ne.s32.totalorder %s116, %s117
    %p129 = scmp.eq.s32.totalorder %s23, 1
    %p130 = por %p128, %p129
    %p132 = scmp.ne.s32.totalorder %s117, %s131
    %p133 = scmp.eq.s32.totalorder %s23, 0
    %p134 = por %p132, %p133
    %s136 = sadd.s32 %s135, 1
    %p139 = scmp.eq.s32.totalorder %s17, 1
    %p140 = scmp.ne.s32.totalorder %s135, %s137
    %p141 = scmp.eq.s32.totalorder %s17, 0
    %p142 = por %p140, %p141
    %p143 = scmp.ne.s32.totalorder %s135, %s137
    %p144 = scmp.eq.s32.totalorder %s22, 1
    %p145 = por %p143, %p144
    %p146 = scmp.ne.s32.totalorder %s137, %s138
    %p147 = scmp.eq.s32.totalorder %s22, 0
    %p148 = por %p146, %p147
    %p149 = scmp.ne.s32.totalorder %s137, %s138
    %p150 = scmp.eq.s32.totalorder %s23, 1
    %p151 = por %p149, %p150
    %p153 = scmp.ne.s32.totalorder %s138, %s152
    %p154 = scmp.eq.s32.totalorder %s23, 0
    %p155 = por %p153, %p154
    %s157 = sadd.s32 %s156, 1
    %p160 = scmp.eq.s32.totalorder %s17, 1
    %p161 = scmp.ne.s32.totalorder %s156, %s158
    %p162 = scmp.eq.s32.totalorder %s17, 0
    %p163 = por %p161, %p162
    %p164 = scmp.ne.s32.totalorder %s156, %s158
    %p165 = scmp.eq.s32.totalorder %s22, 1
    %p166 = por %p164, %p165
    %p167 = scmp.ne.s32.totalorder %s158, %s159
    %p168 = scmp.eq.s32.totalorder %s22, 0
    %p169 = por %p167, %p168
    %p170 = scmp.ne.s32.totalorder %s158, %s159
    %p171 = scmp.eq.s32.totalorder %s23, 1
    %p172 = por %p170, %p171
    %p174 = scmp.ne.s32.totalorder %s159, %s173
    %p175 = scmp.eq.s32.totalorder %s23, 0
    %p176 = por %p174, %p175
    %s178 = sadd.s32 %s177, 1
    %p181 = scmp.eq.s32.totalorder %s17, 1
    %p182 = scmp.ne.s32.totalorder %s177, %s179
    %p183 = scmp.eq.s32.totalorder %s17, 0
    %p184 = por %p182, %p183
    %p185 = scmp.ne.s32.totalorder %s177, %s179
    %p186 = scmp.eq.s32.totalorder %s22, 1
    %p187 = por %p185, %p186
    %p188 = scmp.ne.s32.totalorder %s179, %s180
    %p189 = scmp.eq.s32.totalorder %s22, 0
    %p190 = por %p188, %p189
    %p191 = scmp.ne.s32.totalorder %s179, %s180
    %p192 = scmp.eq.s32.totalorder %s23, 1
    %p193 = por %p191, %p192
    %p195 = scmp.ne.s32.totalorder %s180, %s194
    %p196 = scmp.eq.s32.totalorder %s23, 0
    %p197 = por %p195, %p196
    %s199 = sadd.s32 %s198, 1
    %p202 = scmp.eq.s32.totalorder %s17, 1
    %p203 = scmp.ne.s32.totalorder %s198, %s200
    %p204 = scmp.eq.s32.totalorder %s17, 0
    %p205 = por %p203, %p204
    %p206 = scmp.ne.s32.totalorder %s198, %s200
    %p207 = scmp.eq.s32.totalorder %s22, 1
    %p208 = por %p206, %p207
    %p209 = scmp.ne.s32.totalorder %s200, %s201
    %p210 = scmp.eq.s32.totalorder %s22, 0
    %p211 = por %p209, %p210
    %p212 = scmp.ne.s32.totalorder %s200, %s201
    %p213 = scmp.eq.s32.totalorder %s23, 1
    %p214 = por %p212, %p213
    %p216 = scmp.ne.s32.totalorder %s201, %s215
    %p217 = scmp.eq.s32.totalorder %s23, 0
    %p218 = por %p216, %p217
    %s219 = ssub.s32 %s17, %s24
    %p220 = scmp.eq.s32.totalorder %s219, 0
    %s222 = sadd.s32 %s221, 1
    %s223 = scalar_select %p220, %s221, %s222
    %p226 = pneg %p220
    %p227 = scmp.eq.s32.totalorder %s17, 1
    %p228 = por %p226, %p227
    %p229 = scmp.ne.s32.totalorder %s221, %s224
    %p230 = scmp.eq.s32.totalorder %s17, 0
    %p231 = por %p229, %p230
    %p232 = scmp.ne.s32.totalorder %s221, %s224
    %p233 = scmp.eq.s32.totalorder %s22, 1
    %p234 = por %p232, %p233
    %p235 = scmp.ne.s32.totalorder %s224, %s225
    %p236 = scmp.eq.s32.totalorder %s22, 0
    %p237 = por %p235, %p236
    %p238 = scmp.ne.s32.totalorder %s224, %s225
    %p239 = scmp.eq.s32.totalorder %s23, 1
    %p240 = por %p238, %p239
    %p242 = scmp.ne.s32.totalorder %s225, %s241
    %p243 = scmp.eq.s32.totalorder %s23, 0
    %p244 = por %p242, %p243
    %s245 = ssub.s32 %s17, %s24
    %p246 = scmp.eq.s32.totalorder %s245, 0
    %s248 = sadd.s32 %s247, 1
    %s249 = scalar_select %p246, %s247, %s248
    %p252 = pneg %p246
    %p253 = scmp.eq.s32.totalorder %s17, 1
    %p254 = por %p252, %p253
    %p255 = scmp.ne.s32.totalorder %s247, %s250
    %p256 = scmp.eq.s32.totalorder %s17, 0
    %p257 = por %p255, %p256
    %p258 = scmp.ne.s32.totalorder %s247, %s250
    %p259 = scmp.eq.s32.totalorder %s22, 1
    %p260 = por %p258, %p259
    %p261 = scmp.ne.s32.totalorder %s250, %s251
    %p262 = scmp.eq.s32.totalorder %s22, 0
    %p263 = por %p261, %p262
    %p264 = scmp.ne.s32.totalorder %s250, %s251
    %p265 = scmp.eq.s32.totalorder %s23, 1
    %p266 = por %p264, %p265
    %p268 = scmp.ne.s32.totalorder %s251, %s267
    %p269 = scmp.eq.s32.totalorder %s23, 0
    %p270 = por %p268, %p269
    %p271 = scmp.le.s32.totalorder 1, %s17
    %p272 = scmp.lt.s32.totalorder %s17, 3
    %p273 = pnand %p271, %p272
    %p274 = pneg %p273
    // Predicated region
    $region9: #{tpu_custom_call.1} parent=5 // pred_check
      _
    $region10: #{tpu_custom_call.1} parent=5 // pred_check_branch
      %276 = sbr.rel (%p273) target = $region12
    $region11: #{tpu_custom_call.1} parent=5 // pred_region
      %s277 = ssub.s32 %s17, 1
      // Predicated region
      $region13: #{tpu_custom_call.1} parent=11 // pred_check
        %p278 = pneg %p64
      $region14: #{tpu_custom_call.1} parent=11 // pred_check_branch
        %280 = sbr.rel (%p278) target = $region16
      $region15: #{tpu_custom_call.1} parent=11 // pred_region
        _
      $region16: #{tpu_custom_call.1} parent=11 // pred_fallthru
        _
      // Predicated region
      $region17: #{tpu_custom_call.1} parent=11 // pred_check
        %p281 = pneg %p85
      $region18: #{tpu_custom_call.1} parent=11 // pred_check_branch
        %283 = sbr.rel (%p281) target = $region20
      $region19: #{tpu_custom_call.1} parent=11 // pred_region
        _
      $region20: #{tpu_custom_call.1} parent=11 // pred_fallthru
        _
      // Predicated region
      $region21: #{tpu_custom_call.1} parent=11 // pred_check
        %p284 = pneg %p106
      $region22: #{tpu_custom_call.1} parent=11 // pred_check_branch
        %286 = sbr.rel (%p284) target = $region24
      $region23: #{tpu_custom_call.1} parent=11 // pred_region
        _
      $region24: #{tpu_custom_call.1} parent=11 // pred_fallthru
        _
      // Predicated region
      $region25: #{tpu_custom_call.1} parent=11 // pred_check
        %p287 = pneg %p127
      $region26: #{tpu_custom_call.1} parent=11 // pred_check_branch
        %289 = sbr.rel (%p287) target = $region28
      $region27: #{tpu_custom_call.1} parent=11 // pred_region
        _
      $region28: #{tpu_custom_call.1} parent=11 // pred_fallthru
        _
      // Predicated region
      $region29: #{tpu_custom_call.1} parent=11 // pred_check
        %p290 = pneg %p148
      $region30: #{tpu_custom_call.1} parent=11 // pred_check_branch
        %292 = sbr.rel (%p290) target = $region32
      $region31: #{tpu_custom_call.1} parent=11 // pred_region
        _
      $region32: #{tpu_custom_call.1} parent=11 // pred_fallthru
        _
      // Predicated region
      $region33: #{tpu_custom_call.1} parent=11 // pred_check
        %p293 = pneg %p169
      $region34: #{tpu_custom_call.1} parent=11 // pred_check_branch
        %295 = sbr.rel (%p293) target = $region36
      $region35: #{tpu_custom_call.1} parent=11 // pred_region
        _
      $region36: #{tpu_custom_call.1} parent=11 // pred_fallthru
        _
      // Predicated region
      $region37: #{tpu_custom_call.1} parent=11 // pred_check
        %p296 = pneg %p190
      $region38: #{tpu_custom_call.1} parent=11 // pred_check_branch
        %298 = sbr.rel (%p296) target = $region40
      $region39: #{tpu_custom_call.1} parent=11 // pred_region
        _
      $region40: #{tpu_custom_call.1} parent=11 // pred_fallthru
        _
      // Predicated region
      $region41: #{tpu_custom_call.1} parent=11 // pred_check
        %p299 = pneg %p211
      $region42: #{tpu_custom_call.1} parent=11 // pred_check_branch
        %301 = sbr.rel (%p299) target = $region44
      $region43: #{tpu_custom_call.1} parent=11 // pred_region
        _
      $region44: #{tpu_custom_call.1} parent=11 // pred_fallthru
        _
    $region12: #{tpu_custom_call.1} parent=5 // pred_fallthru
      _
    %p302 = scmp.lt.s32.totalorder %s17, 2
    // Predicated region
    $region45: #{tpu_custom_call.1} parent=5 // pred_check
      %p303 = pneg %p302
    $region46: #{tpu_custom_call.1} parent=5 // pred_check_branch
      %305 = sbr.rel (%p303) target = $region48
    $region47: #{tpu_custom_call.1} parent=5 // pred_region
      // Predicated region
      $region49: #{tpu_custom_call.1} parent=47 // pred_check
        %p306 = pneg %p37
      $region50: #{tpu_custom_call.1} parent=47 // pred_check_branch
        %308 = sbr.rel (%p306) target = $region52
      $region51: #{tpu_custom_call.1} parent=47 // pred_region
        %p309 = scmp.lt.s32.totalorder %s17, 1
        %s310 = scalar_select %p309, %s17, 1
        %s311 = smul.addr %s310, 32
        %s312 = smul.addr %s311, 4
        %s313 = scalar_lea.vmem %s0, %s312
      $region52: #{tpu_custom_call.1} parent=47 // pred_fallthru
        _
    $region48: #{tpu_custom_call.1} parent=5 // pred_fallthru
      _
    %p314 = scmp.le.s32.totalorder 1, %s17
    %p315 = scmp.lt.s32.totalorder %s17, 3
    %p316 = pnand %p314, %p315
    %p317 = pneg %p316
    // Predicated region
    $region53: #{tpu_custom_call.1} parent=5 // pred_check
      _
    $region54: #{tpu_custom_call.1} parent=5 // pred_check_branch
      %319 = sbr.rel (%p316) target = $region56
    $region55: #{tpu_custom_call.1} parent=5 // pred_region
      %s320 = ssub.s32 %s17, 1
      %p321 = scmp.lt.s32.totalorder %s22, 1
      %s322 = scalar_select %p321, %s22, 1
      %s323 = smul.addr %s322, 32
      %s324 = smul.addr %s323, 4
      %s325 = scalar_lea.vmem %s0, %s324
      %p326 = pneg %p43
      %p327 = pneg %p40
      %p328 = pneg %p64
      %p329 = pneg %p61
      %p330 = pneg %p85
      %p331 = pneg %p82
      %p332 = pneg %p106
      %p333 = pneg %p103
      %p334 = pneg %p127
      %p335 = pneg %p124
      %p336 = pneg %p148
      %p337 = pneg %p145
      %p338 = pneg %p169
      %p339 = pneg %p166
      %p340 = pneg %p190
      %p341 = pneg %p187
      %p342 = pneg %p211
      %p343 = pneg %p208
      %p344 = pneg %p237
      %p345 = pneg %p234
      %p346 = scmp.lt.s32.totalorder %s22, 1
      %s347 = scalar_select %p346, %s22, 1
      %s348 = smul.addr %s347, 8
      %s349 = smul.addr %s348, 8
      %s350 = scalar_lea.vmem %s9, %s349
      %p351 = pneg %p263
      %p352 = pneg %p260
      %p353 = scmp.lt.s32.totalorder %s22, 1
      %s354 = scalar_select %p353, %s22, 1
      %s355 = smul.addr %s354, 4
      %s356 = smul.addr %s355, 8
      %s357 = scalar_lea.vmem %s10, %s356
      %p358 = scmp.lt.s32.totalorder %s22, 1
      %s359 = scalar_select %p358, %s22, 1
      %s360 = smul.addr %s359, 32
      %s361 = smul.addr %s360, 4
      %s362 = scalar_lea.vmem %s0, %s361
      %p363 = scmp.lt.s32.totalorder %s22, 1
      %s364 = scalar_select %p363, %s22, 1
      %s365 = smul.addr %s364, 8
      %s366 = smul.addr %s365, 8
      %s367 = scalar_lea.vmem %s9, %s366
      %p368 = scmp.lt.s32.totalorder %s22, 1
      %s369 = scalar_select %p368, %s22, 1
      %s370 = smul.addr %s369, 4
      %s371 = smul.addr %s370, 8
      %s372 = scalar_lea.vmem %s10, %s371
      %vm374 = vcmask 60416
      %375 = vst.msk [vmem:[#allocation2] sm:$0xf] %vm374, 0
      %376 = vst.msk [vmem:[#allocation2 + $0x4] sm:$0xf] %vm374, 0
      %377 = vst.msk [vmem:[#allocation2 + $0x30] sm:$0xf] %vm374, 0
      %378 = vst.msk [vmem:[#allocation2 + $0x34] sm:$0xf] %vm374, 0
      %379 = vst.msk [vmem:[#allocation2 + $0x60] sm:$0xf] %vm374, 0
      %380 = vst.msk [vmem:[#allocation2 + $0x64] sm:$0xf] %vm374, 0
      %381 = vst.msk [vmem:[#allocation2 + $0x90] sm:$0xf] %vm374, 0
      %382 = vst.msk [vmem:[#allocation2 + $0x94] sm:$0xf] %vm374, 0
      %383 = vst.msk [vmem:[#allocation2 + $0x28] sm:$0xf] %vm374, 0
      %384 = vst.msk [vmem:[#allocation2 + $0x2c] sm:$0xf] %vm374, 0
      %385 = vst.msk [vmem:[#allocation2 + $0x58] sm:$0xf] %vm374, 0
      %386 = vst.msk [vmem:[#allocation2 + $0x5c] sm:$0xf] %vm374, 0
      %387 = vst.msk [vmem:[#allocation2 + $0x88] sm:$0xf] %vm374, 0
      %388 = vst.msk [vmem:[#allocation2 + $0x8c] sm:$0xf] %vm374, 0
      %389 = vst.msk [vmem:[#allocation2 + $0xb8] sm:$0xf] %vm374, 0
      %390 = vst.msk [vmem:[#allocation2 + $0xbc] sm:$0xf] %vm374, 0
      %vm391 = vcmask 125952
      %392 = vst.msk [vmem:[#allocation3] sm:$0xf] %vm391, 0
      %393 = vst.msk [vmem:[#allocation3 + $0x4] sm:$0xf] %vm391, 0
      %394 = vst.msk [vmem:[#allocation3 + $0x28] sm:$0xf] %vm391, 0
      %395 = vst.msk [vmem:[#allocation3 + $0x2c] sm:$0xf] %vm391, 0
      %v396 = vld [vmem:[%s362] sm:$0xf]
      %v397 = vld [vmem:[%s362 + $0x4] sm:$0xf]
      %v398 = vld [vmem:[%s362 + $0x8] sm:$0xf]
      %v399 = vld [vmem:[%s362 + $0xc] sm:$0xf]
      %v400 = vld [vmem:[%s362 + $0x10] sm:$0xf]
      %v401 = vld [vmem:[%s362 + $0x14] sm:$0xf]
      %v402 = vld [vmem:[%s362 + $0x18] sm:$0xf]
      %v403 = vld [vmem:[%s362 + $0x1c] sm:$0xf]
      %v404 = vld [vmem:[%s362 + $0x20] sm:$0xf]
      %v405 = vld [vmem:[%s362 + $0x24] sm:$0xf]
      %v406 = vld [vmem:[%s362 + $0x28] sm:$0xf]
      %v407 = vld [vmem:[%s362 + $0x2c] sm:$0xf]
      %v408 = vld [vmem:[%s362 + $0x30] sm:$0xf]
      %v409 = vld [vmem:[%s362 + $0x34] sm:$0xf]
      %v410 = vld [vmem:[%s362 + $0x38] sm:$0xf]
      %v411 = vld [vmem:[%s362 + $0x3c] sm:$0xf]
      %v412 = vld [vmem:[%s362 + $0x40] sm:$0xf]
      %v413 = vld [vmem:[%s362 + $0x44] sm:$0xf]
      %v414 = vld [vmem:[%s362 + $0x48] sm:$0xf]
      %v415 = vld [vmem:[%s362 + $0x4c] sm:$0xf]
      %v416 = vld [vmem:[%s362 + $0x50] sm:$0xf]
      %v417 = vld [vmem:[%s362 + $0x54] sm:$0xf]
      %v418 = vld [vmem:[%s362 + $0x58] sm:$0xf]
      %v419 = vld [vmem:[%s362 + $0x5c] sm:$0xf]
      %v420 = vld [vmem:[%s362 + $0x60] sm:$0xf]
      %v421 = vld [vmem:[%s362 + $0x64] sm:$0xf]
      %v422 = vld [vmem:[%s362 + $0x68] sm:$0xf]
      %v423 = vld [vmem:[%s362 + $0x6c] sm:$0xf]
      %v424 = vld [vmem:[%s362 + $0x70] sm:$0xf]
      %v425 = vld [vmem:[%s362 + $0x74] sm:$0xf]
      %v426 = vld [vmem:[%s362 + $0x78] sm:$0xf]
      %v427 = vld [vmem:[%s362 + $0x7c] sm:$0xf]
      %v428 = vld [vmem:[%s1] sm:$0x3]
      %v461 = vunpack.c.l.b16 %v396
      %v462 = vunpack.c.l.b16 %v397
      %v463 = vunpack.c.l.b16 %v398
      %v464 = vunpack.c.l.b16 %v399
      %v465 = vunpack.c.l.b16 %v400
      %v466 = vunpack.c.l.b16 %v401
      %v467 = vunpack.c.l.b16 %v402
      %v468 = vunpack.c.l.b16 %v403
      %v469 = vunpack.c.l.b16 %v404
      %v470 = vunpack.c.l.b16 %v405
      %v471 = vunpack.c.l.b16 %v406
      %v472 = vunpack.c.l.b16 %v407
      %v473 = vunpack.c.l.b16 %v408
      %v474 = vunpack.c.l.b16 %v409
      %v475 = vunpack.c.l.b16 %v410
      %v476 = vunpack.c.l.b16 %v411
      %v477 = vunpack.c.l.b16 %v412
      %v478 = vunpack.c.l.b16 %v413
      %v479 = vunpack.c.l.b16 %v414
      %v480 = vunpack.c.l.b16 %v415
      %v481 = vunpack.c.l.b16 %v416
      %v482 = vunpack.c.l.b16 %v417
      %v483 = vunpack.c.l.b16 %v418
      %v484 = vunpack.c.l.b16 %v419
      %v485 = vunpack.c.l.b16 %v420
      %v486 = vunpack.c.l.b16 %v421
      %v487 = vunpack.c.l.b16 %v422
      %v488 = vunpack.c.l.b16 %v423
      %v489 = vunpack.c.l.b16 %v424
      %v490 = vunpack.c.l.b16 %v425
      %v491 = vunpack.c.l.b16 %v426
      %v492 = vunpack.c.l.b16 %v427
      %v493 = vpack.c.b16 %v462, %v461
      %v494 = vpack.c.b16 %v464, %v463
      %v495 = vpack.c.b16 %v466, %v465
      %v496 = vpack.c.b16 %v468, %v467
      %v497 = vpack.c.b16 %v470, %v469
      %v498 = vpack.c.b16 %v472, %v471
      %v499 = vpack.c.b16 %v474, %v473
      %v500 = vpack.c.b16 %v476, %v475
      %v501 = vpack.c.b16 %v478, %v477
      %v502 = vpack.c.b16 %v480, %v479
      %v503 = vpack.c.b16 %v482, %v481
      %v504 = vpack.c.b16 %v484, %v483
      %v505 = vpack.c.b16 %v486, %v485
      %v506 = vpack.c.b16 %v488, %v487
      %v507 = vpack.c.b16 %v490, %v489
      %v508 = vpack.c.b16 %v492, %v491
      %vm509 = vcmask 31744
      %v511 = vsel %vm509, %v493, 0
      %v514 = vsel %vm509, %v494, 0
      %v517 = vsel %vm509, %v495, 0
      %v520 = vsel %vm509, %v496, 0
      %v523 = vsel %vm509, %v497, 0
      %v526 = vsel %vm509, %v498, 0
      %v529 = vsel %vm509, %v499, 0
      %v532 = vsel %vm509, %v500, 0
      %v535 = vsel %vm509, %v501, 0
      %v538 = vsel %vm509, %v502, 0
      %v541 = vsel %vm509, %v503, 0
      %v544 = vsel %vm509, %v504, 0
      %v547 = vsel %vm509, %v505, 0
      %v550 = vsel %vm509, %v506, 0
      %v553 = vsel %vm509, %v507, 0
      %v556 = vsel %vm509, %v508, 0
      %vm558 = vcmask 1041408
      %v560 = vsel %vm558, %v428, 0
      %562 = vmatprep.subr.bf16.mxu0 0
      %563 = vmatpush1.bf16.msra.mxu0 0
      %564 = vmatprep.subr.bf16.mxu0 0
      %565 = vmatpush1.bf16.msra.mxu0 0
      %566 = vmatprep.subr.bf16.mxu0 0
      %567 = vmatpush1.bf16.msra.mxu0 0
      %568 = vmatprep.subr.bf16.mxu0 0
      %569 = vmatpush1.bf16.msra.mxu0 0
      %570 = vmatprep.subr.bf16.mxu0 0
      %571 = vmatpush1.bf16.msra.mxu0 0
      %572 = vmatprep.subr.bf16.mxu0 0
      %573 = vmatpush1.bf16.msra.mxu0 0
      %574 = vmatprep.subr.bf16.mxu0 0
      %575 = vmatpush1.bf16.msra.mxu0 0
      %576 = vmatprep.subr.bf16.mxu0 0
      %577 = vmatpush1.bf16.msra.mxu0 %v560
      %578 = vmatprep.subr.bf16.mxu0 0
      %579 = vmatpush2.bf16.msra.mxu0 0
      %580 = vmatprep.subr.bf16.mxu0 0
      %581 = vmatpush2.bf16.msra.mxu0 0
      %582 = vmatprep.subr.bf16.mxu0 0
      %583 = vmatpush2.bf16.msra.mxu0 0
      %584 = vmatprep.subr.bf16.mxu0 0
      %585 = vmatpush2.bf16.msra.mxu0 0
      %586 = vmatprep.subr.bf16.mxu0 0
      %587 = vmatpush2.bf16.msra.mxu0 0
      %588 = vmatprep.subr.bf16.mxu0 0
      %589 = vmatpush2.bf16.msra.mxu0 0
      %590 = vmatprep.subr.bf16.mxu0 0
      %591 = vmatpush2.bf16.msra.mxu0 0
      %592 = vmatprep.subr.bf16.mxu0 0
      %593 = vmatpush2.bf16.msra.mxu0 0
      %594 = vmatprep.mubr.bf16.mxu0 0
      %595 = vmatmul.mubr.bf16.gmra.mxu0 %v511
      %v596 = vpop.f32.mrf.mxu0
      %v597 = vadd.f32 0.0, %v596
      %v598 = vpop.f32.mrf.mxu0
      %v599 = vpop.f32.mrf.mxu0
      %v600 = vadd.f32 0.0, %v599
      %v601 = vpop.f32.mrf.mxu0
      %602 = vmatprep.mubr.bf16.mxu0 0
      %603 = vmatmul.mubr.bf16.gmra.mxu0 %v514
      %v604 = vpop.f32.mrf.mxu0
      %v605 = vadd.f32 0.0, %v604
      %v606 = vpop.f32.mrf.mxu0
      %v607 = vpop.f32.mrf.mxu0
      %v608 = vadd.f32 0.0, %v607
      %v609 = vpop.f32.mrf.mxu0
      %610 = vmatprep.mubr.bf16.mxu0 0
      %611 = vmatmul.mubr.bf16.gmra.mxu0 %v517
      %v612 = vpop.f32.mrf.mxu0
      %v613 = vadd.f32 0.0, %v612
      %v614 = vpop.f32.mrf.mxu0
      %v615 = vpop.f32.mrf.mxu0
      %v616 = vadd.f32 0.0, %v615
      %v617 = vpop.f32.mrf.mxu0
      %618 = vmatprep.mubr.bf16.mxu0 0
      %619 = vmatmul.mubr.bf16.gmra.mxu0 %v520
      %v620 = vpop.f32.mrf.mxu0
      %v621 = vadd.f32 0.0, %v620
      %v622 = vpop.f32.mrf.mxu0
      %v623 = vpop.f32.mrf.mxu0
      %v624 = vadd.f32 0.0, %v623
      %v625 = vpop.f32.mrf.mxu0
      %626 = vmatprep.mubr.bf16.mxu0 0
      %627 = vmatmul.mubr.bf16.gmra.mxu0 %v523
      %v628 = vpop.f32.mrf.mxu0
      %v629 = vadd.f32 0.0, %v628
      %v630 = vpop.f32.mrf.mxu0
      %v631 = vpop.f32.mrf.mxu0
      %v632 = vadd.f32 0.0, %v631
      %v633 = vpop.f32.mrf.mxu0
      %634 = vmatprep.mubr.bf16.mxu0 0
      %635 = vmatmul.mubr.bf16.gmra.mxu0 %v526
      %v636 = vpop.f32.mrf.mxu0
      %v637 = vadd.f32 0.0, %v636
      %v638 = vpop.f32.mrf.mxu0
      %v639 = vpop.f32.mrf.mxu0
      %v640 = vadd.f32 0.0, %v639
      %v641 = vpop.f32.mrf.mxu0
      %642 = vmatprep.mubr.bf16.mxu0 0
      %643 = vmatmul.mubr.bf16.gmra.mxu0 %v529
      %v644 = vpop.f32.mrf.mxu0
      %v645 = vadd.f32 0.0, %v644
      %v646 = vpop.f32.mrf.mxu0
      %v647 = vpop.f32.mrf.mxu0
      %v648 = vadd.f32 0.0, %v647
      %v649 = vpop.f32.mrf.mxu0
      %650 = vmatprep.mubr.bf16.mxu0 0
      %651 = vmatmul.mubr.bf16.gmra.mxu0 %v532
      %v652 = vpop.f32.mrf.mxu0
      %v653 = vadd.f32 0.0, %v652
      %v654 = vpop.f32.mrf.mxu0
      %v655 = vpop.f32.mrf.mxu0
      %v656 = vadd.f32 0.0, %v655
      %v657 = vpop.f32.mrf.mxu0
      %658 = vmatprep.mubr.bf16.mxu0 0
      %659 = vmatmul.mubr.bf16.gmra.mxu0 %v535
      %v660 = vpop.f32.mrf.mxu0
      %v661 = vadd.f32 0.0, %v660
      %v662 = vpop.f32.mrf.mxu0
      %v663 = vpop.f32.mrf.mxu0
      %v664 = vadd.f32 0.0, %v663
      %v665 = vpop.f32.mrf.mxu0
      %666 = vmatprep.mubr.bf16.mxu0 0
      %667 = vmatmul.mubr.bf16.gmra.mxu0 %v538
      %v668 = vpop.f32.mrf.mxu0
      %v669 = vadd.f32 0.0, %v668
      %v670 = vpop.f32.mrf.mxu0
      %v671 = vpop.f32.mrf.mxu0
      %v672 = vadd.f32 0.0, %v671
      %v673 = vpop.f32.mrf.mxu0
      %674 = vmatprep.mubr.bf16.mxu0 0
      %675 = vmatmul.mubr.bf16.gmra.mxu0 %v541
      %v676 = vpop.f32.mrf.mxu0
      %v677 = vadd.f32 0.0, %v676
      %v678 = vpop.f32.mrf.mxu0
      %v679 = vpop.f32.mrf.mxu0
      %v680 = vadd.f32 0.0, %v679
      %v681 = vpop.f32.mrf.mxu0
      %682 = vmatprep.mubr.bf16.mxu0 0
      %683 = vmatmul.mubr.bf16.gmra.mxu0 %v544
      %v684 = vpop.f32.mrf.mxu0
      %v685 = vadd.f32 0.0, %v684
      %v686 = vpop.f32.mrf.mxu0
      %v687 = vpop.f32.mrf.mxu0
      %v688 = vadd.f32 0.0, %v687
      %v689 = vpop.f32.mrf.mxu0
      %690 = vmatprep.mubr.bf16.mxu0 0
      %691 = vmatmul.mubr.bf16.gmra.mxu0 %v547
      %v692 = vpop.f32.mrf.mxu0
      %v693 = vadd.f32 0.0, %v692
      %v694 = vpop.f32.mrf.mxu0
      %v695 = vpop.f32.mrf.mxu0
      %v696 = vadd.f32 0.0, %v695
      %v697 = vpop.f32.mrf.mxu0
      %698 = vmatprep.mubr.bf16.mxu0 0
      %699 = vmatmul.mubr.bf16.gmra.mxu0 %v550
      %v700 = vpop.f32.mrf.mxu0
      %v701 = vadd.f32 0.0, %v700
      %v702 = vpop.f32.mrf.mxu0
      %v703 = vpop.f32.mrf.mxu0
      %v704 = vadd.f32 0.0, %v703
      %v705 = vpop.f32.mrf.mxu0
      %706 = vmatprep.mubr.bf16.mxu0 0
      %707 = vmatmul.mubr.bf16.gmra.mxu0 %v553
      %v708 = vpop.f32.mrf.mxu0
      %v709 = vadd.f32 0.0, %v708
      %v710 = vpop.f32.mrf.mxu0
      %v711 = vpop.f32.mrf.mxu0
      %v712 = vadd.f32 0.0, %v711
      %v713 = vpop.f32.mrf.mxu0
      %714 = vmatprep.mubr.bf16.mxu0 0
      %715 = vmatmul.mubr.bf16.gmra.mxu0 %v556
      %v716 = vpop.f32.mrf.mxu0
      %v717 = vadd.f32 0.0, %v716
      %v718 = vpop.f32.mrf.mxu0
      %v719 = vpop.f32.mrf.mxu0
      %v720 = vadd.f32 0.0, %v719
      %v721 = vpop.f32.mrf.mxu0
      %722 = vdwg.mxu0
      %v723 = vld [vmem:[%s2] sm:$0x1]
      %v725 = vlaneseq
      %v726 = vshrl.u32 %v725, 7
      %v727 = vsub.s32 0, %v726
      %v728 = vrot.slane %v723, %v727
      %v730 = vmul.f32 %v597, %v728
      %v731 = vmul.f32 %v600, %v728
      %v732 = vmul.f32 %v605, %v728
      %v733 = vmul.f32 %v608, %v728
      %v734 = vmul.f32 %v613, %v728
      %v735 = vmul.f32 %v616, %v728
      %v736 = vmul.f32 %v621, %v728
      %v737 = vmul.f32 %v624, %v728
      %v738 = vmul.f32 %v629, %v728
      %v739 = vmul.f32 %v632, %v728
      %v740 = vmul.f32 %v637, %v728
      %v741 = vmul.f32 %v640, %v728
      %v742 = vmul.f32 %v645, %v728
      %v743 = vmul.f32 %v648, %v728
      %v744 = vmul.f32 %v653, %v728
      %v745 = vmul.f32 %v656, %v728
      %v746 = vmul.f32 %v661, %v728
      %v747 = vmul.f32 %v664, %v728
      %v748 = vmul.f32 %v669, %v728
      %v749 = vmul.f32 %v672, %v728
      %v750 = vmul.f32 %v677, %v728
      %v751 = vmul.f32 %v680, %v728
      %v752 = vmul.f32 %v685, %v728
      %v753 = vmul.f32 %v688, %v728
      %v754 = vmul.f32 %v693, %v728
      %v755 = vmul.f32 %v696, %v728
      %v756 = vmul.f32 %v701, %v728
      %v757 = vmul.f32 %v704, %v728
      %v758 = vmul.f32 %v709, %v728
      %v759 = vmul.f32 %v712, %v728
      %v760 = vmul.f32 %v717, %v728
      %v761 = vmul.f32 %v720, %v728
      %v762 = vld [vmem:[%s3] sm:$0x1]
      %v764 = vlaneseq
      %v765 = vshrl.u32 %v764, 7
      %v766 = vsub.s32 0, %v765
      %v767 = vrot.slane %v762, %v766
      %v769 = vadd.f32 %v730, %v767
      %v770 = vadd.f32 %v731, %v767
      %v771 = vadd.f32 %v732, %v767
      %v772 = vadd.f32 %v733, %v767
      %v773 = vadd.f32 %v734, %v767
      %v774 = vadd.f32 %v735, %v767
      %v775 = vadd.f32 %v736, %v767
      %v776 = vadd.f32 %v737, %v767
      %v777 = vadd.f32 %v738, %v767
      %v778 = vadd.f32 %v739, %v767
      %v779 = vadd.f32 %v740, %v767
      %v780 = vadd.f32 %v741, %v767
      %v781 = vadd.f32 %v742, %v767
      %v782 = vadd.f32 %v743, %v767
      %v783 = vadd.f32 %v744, %v767
      %v784 = vadd.f32 %v745, %v767
      %v785 = vadd.f32 %v746, %v767
      %v786 = vadd.f32 %v747, %v767
      %v787 = vadd.f32 %v748, %v767
      %v788 = vadd.f32 %v749, %v767
      %v789 = vadd.f32 %v750, %v767
      %v790 = vadd.f32 %v751, %v767
      %v791 = vadd.f32 %v752, %v767
      %v792 = vadd.f32 %v753, %v767
      %v793 = vadd.f32 %v754, %v767
      %v794 = vadd.f32 %v755, %v767
      %v795 = vadd.f32 %v756, %v767
      %v796 = vadd.f32 %v757, %v767
      %v797 = vadd.f32 %v758, %v767
      %v798 = vadd.f32 %v759, %v767
      %v799 = vadd.f32 %v760, %v767
      %v800 = vadd.f32 %v761, %v767
      %v801 = vmax.f32 %v769, 0.0
      %v802 = vmax.f32 %v770, 0.0
      %v803 = vmax.f32 %v771, 0.0
      %v804 = vmax.f32 %v772, 0.0
      %v805 = vmax.f32 %v773, 0.0
      %v806 = vmax.f32 %v774, 0.0
      %v807 = vmax.f32 %v775, 0.0
      %v808 = vmax.f32 %v776, 0.0
      %v809 = vmax.f32 %v777, 0.0
      %v810 = vmax.f32 %v778, 0.0
      %v811 = vmax.f32 %v779, 0.0
      %v812 = vmax.f32 %v780, 0.0
      %v813 = vmax.f32 %v781, 0.0
      %v814 = vmax.f32 %v782, 0.0
      %v815 = vmax.f32 %v783, 0.0
      %v816 = vmax.f32 %v784, 0.0
      %v817 = vmax.f32 %v785, 0.0
      %v818 = vmax.f32 %v786, 0.0
      %v819 = vmax.f32 %v787, 0.0
      %v820 = vmax.f32 %v788, 0.0
      %v821 = vmax.f32 %v789, 0.0
      %v822 = vmax.f32 %v790, 0.0
      %v823 = vmax.f32 %v791, 0.0
      %v824 = vmax.f32 %v792, 0.0
      %v825 = vmax.f32 %v793, 0.0
      %v826 = vmax.f32 %v794, 0.0
      %v827 = vmax.f32 %v795, 0.0
      %v828 = vmax.f32 %v796, 0.0
      %v829 = vmax.f32 %v797, 0.0
      %v830 = vmax.f32 %v798, 0.0
      %v831 = vmax.f32 %v799, 0.0
      %v832 = vmax.f32 %v800, 0.0
      %v833 = vpack.c.bf16 %v802, %v801
      %v834 = vpack.c.bf16 %v804, %v803
      %v835 = vpack.c.bf16 %v806, %v805
      %v836 = vpack.c.bf16 %v808, %v807
      %v837 = vpack.c.bf16 %v810, %v809
      %v838 = vpack.c.bf16 %v812, %v811
      %v839 = vpack.c.bf16 %v814, %v813
      %v840 = vpack.c.bf16 %v816, %v815
      %v841 = vpack.c.bf16 %v818, %v817
      %v842 = vpack.c.bf16 %v820, %v819
      %v843 = vpack.c.bf16 %v822, %v821
      %v844 = vpack.c.bf16 %v824, %v823
      %v845 = vpack.c.bf16 %v826, %v825
      %v846 = vpack.c.bf16 %v828, %v827
      %v847 = vpack.c.bf16 %v830, %v829
      %v848 = vpack.c.bf16 %v832, %v831
      %v853 = vunpack.c.l.b16 %v833
      %v854 = vunpack.c.h.b16 %v833
      %v855 = vunpack.c.l.b16 %v834
      %v856 = vunpack.c.h.b16 %v834
      %v857 = vunpack.c.l.b16 %v835
      %v858 = vunpack.c.h.b16 %v835
      %v859 = vunpack.c.l.b16 %v836
      %v860 = vunpack.c.h.b16 %v836
      %v861 = vpack.c.b16 %v853, %v853
      %v862 = vpack.c.b16 %v854, %v854
      %v863 = vpack.c.b16 %v855, %v855
      %v864 = vpack.c.b16 %v856, %v856
      %v865 = vpack.c.b16 %v857, %v857
      %v866 = vpack.c.b16 %v858, %v858
      %v867 = vpack.c.b16 %v859, %v859
      %v868 = vpack.c.b16 %v860, %v860
      %877 = vst.msk [vmem:[#allocation2 + $0x8] sm:$0xf] %vm374, %v861
      %878 = vst.msk [vmem:[#allocation2 + $0xc] sm:$0xf] %vm374, %v862
      %879 = vst.msk [vmem:[#allocation2 + $0x10] sm:$0xf] %vm374, %v863
      %880 = vst.msk [vmem:[#allocation2 + $0x14] sm:$0xf] %vm374, %v864
      %881 = vst.msk [vmem:[#allocation2 + $0x18] sm:$0xf] %vm374, %v865
      %882 = vst.msk [vmem:[#allocation2 + $0x1c] sm:$0xf] %vm374, %v866
      %883 = vst.msk [vmem:[#allocation2 + $0x20] sm:$0xf] %vm374, %v867
      %884 = vst.msk [vmem:[#allocation2 + $0x24] sm:$0xf] %vm374, %v868
      %v889 = vunpack.c.l.b16 %v837
      %v890 = vunpack.c.h.b16 %v837
      %v891 = vunpack.c.l.b16 %v838
      %v892 = vunpack.c.h.b16 %v838
      %v893 = vunpack.c.l.b16 %v839
      %v894 = vunpack.c.h.b16 %v839
      %v895 = vunpack.c.l.b16 %v840
      %v896 = vunpack.c.h.b16 %v840
      %v897 = vpack.c.b16 %v889, %v889
      %v898 = vpack.c.b16 %v890, %v890
      %v899 = vpack.c.b16 %v891, %v891
      %v900 = vpack.c.b16 %v892, %v892
      %v901 = vpack.c.b16 %v893, %v893
      %v902 = vpack.c.b16 %v894, %v894
      %v903 = vpack.c.b16 %v895, %v895
      %v904 = vpack.c.b16 %v896, %v896
      %s913 = scalar_lea.vmem [#allocation2], 48
      %914 = vst.msk [vmem:[%s913 + $0x8] sm:$0xf] %vm374, %v897
      %915 = vst.msk [vmem:[%s913 + $0xc] sm:$0xf] %vm374, %v898
      %916 = vst.msk [vmem:[%s913 + $0x10] sm:$0xf] %vm374, %v899
      %917 = vst.msk [vmem:[%s913 + $0x14] sm:$0xf] %vm374, %v900
      %918 = vst.msk [vmem:[%s913 + $0x18] sm:$0xf] %vm374, %v901
      %919 = vst.msk [vmem:[%s913 + $0x1c] sm:$0xf] %vm374, %v902
      %920 = vst.msk [vmem:[%s913 + $0x20] sm:$0xf] %vm374, %v903
      %921 = vst.msk [vmem:[%s913 + $0x24] sm:$0xf] %vm374, %v904
      %v926 = vunpack.c.l.b16 %v841
      %v927 = vunpack.c.h.b16 %v841
      %v928 = vunpack.c.l.b16 %v842
      %v929 = vunpack.c.h.b16 %v842
      %v930 = vunpack.c.l.b16 %v843
      %v931 = vunpack.c.h.b16 %v843
      %v932 = vunpack.c.l.b16 %v844
      %v933 = vunpack.c.h.b16 %v844
      %v934 = vpack.c.b16 %v926, %v926
      %v935 = vpack.c.b16 %v927, %v927
      %v936 = vpack.c.b16 %v928, %v928
      %v937 = vpack.c.b16 %v929, %v929
      %v938 = vpack.c.b16 %v930, %v930
      %v939 = vpack.c.b16 %v931, %v931
      %v940 = vpack.c.b16 %v932, %v932
      %v941 = vpack.c.b16 %v933, %v933
      %s950 = scalar_lea.vmem [#allocation2], 96
      %951 = vst.msk [vmem:[%s950 + $0x8] sm:$0xf] %vm374, %v934
      %952 = vst.msk [vmem:[%s950 + $0xc] sm:$0xf] %vm374, %v935
      %953 = vst.msk [vmem:[%s950 + $0x10] sm:$0xf] %vm374, %v936
      %954 = vst.msk [vmem:[%s950 + $0x14] sm:$0xf] %vm374, %v937
      %955 = vst.msk [vmem:[%s950 + $0x18] sm:$0xf] %vm374, %v938
      %956 = vst.msk [vmem:[%s950 + $0x1c] sm:$0xf] %vm374, %v939
      %957 = vst.msk [vmem:[%s950 + $0x20] sm:$0xf] %vm374, %v940
      %958 = vst.msk [vmem:[%s950 + $0x24] sm:$0xf] %vm374, %v941
      %v963 = vunpack.c.l.b16 %v845
      %v964 = vunpack.c.h.b16 %v845
      %v965 = vunpack.c.l.b16 %v846
      %v966 = vunpack.c.h.b16 %v846
      %v967 = vunpack.c.l.b16 %v847
      %v968 = vunpack.c.h.b16 %v847
      %v969 = vunpack.c.l.b16 %v848
      %v970 = vunpack.c.h.b16 %v848
      %v971 = vpack.c.b16 %v963, %v963
      %v972 = vpack.c.b16 %v964, %v964
      %v973 = vpack.c.b16 %v965, %v965
      %v974 = vpack.c.b16 %v966, %v966
      %v975 = vpack.c.b16 %v967, %v967
      %v976 = vpack.c.b16 %v968, %v968
      %v977 = vpack.c.b16 %v969, %v969
      %v978 = vpack.c.b16 %v970, %v970
      %s987 = scalar_lea.vmem [#allocation2], 144
      %988 = vst.msk [vmem:[%s987 + $0x8] sm:$0xf] %vm374, %v971
      %989 = vst.msk [vmem:[%s987 + $0xc] sm:$0xf] %vm374, %v972
      %990 = vst.msk [vmem:[%s987 + $0x10] sm:$0xf] %vm374, %v973
      %991 = vst.msk [vmem:[%s987 + $0x14] sm:$0xf] %vm374, %v974
      %992 = vst.msk [vmem:[%s987 + $0x18] sm:$0xf] %vm374, %v975
      %993 = vst.msk [vmem:[%s987 + $0x1c] sm:$0xf] %vm374, %v976
      %994 = vst.msk [vmem:[%s987 + $0x20] sm:$0xf] %vm374, %v977
      %995 = vst.msk [vmem:[%s987 + $0x24] sm:$0xf] %vm374, %v978
      %v996 = vlaneseq
      %v997 = vshrl.u32 %v996, 7
      %v998 = vadd.s32 %v997, 8
      %v999 = vadd.s32 %v997, 16
      %v1000 = vadd.s32 %v997, 24
      %v1001 = vadd.s32 %v997, 32
      %v1002 = vadd.s32 %v997, 40
      %v1003 = vadd.s32 %v997, 48
      %v1004 = vadd.s32 %v997, 56
      %vm1005 = vcmp.lt.s32.totalorder %v997, 0
      %v1006 = vsub.s32 0, %v997
      %v1007 = vsel %vm1005, %v1006, %v997
      %v1008 = vshrl.u32 %v1007, 3
      %v1009 = vand.u32 %v1007, 7
      %v1010 = vsub.s32 0, %v1009
      %v1011 = vsel %vm1005, %v1010, %v1009
      %vm1012 = vcmp.lt.s32.totalorder %v998, 0
      %v1013 = vsub.s32 0, %v998
      %v1014 = vsel %vm1012, %v1013, %v998
      %v1015 = vshrl.u32 %v1014, 3
      %v1016 = vand.u32 %v1014, 7
      %v1017 = vsub.s32 0, %v1016
      %v1018 = vsel %vm1012, %v1017, %v1016
      %vm1019 = vcmp.lt.s32.totalorder %v999, 0
      %v1020 = vsub.s32 0, %v999
      %v1021 = vsel %vm1019, %v1020, %v999
      %v1022 = vshrl.u32 %v1021, 3
      %v1023 = vand.u32 %v1021, 7
      %v1024 = vsub.s32 0, %v1023
      %v1025 = vsel %vm1019, %v1024, %v1023
      %vm1026 = vcmp.lt.s32.totalorder %v1000, 0
      %v1027 = vsub.s32 0, %v1000
      %v1028 = vsel %vm1026, %v1027, %v1000
      %v1029 = vshrl.u32 %v1028, 3
      %v1030 = vand.u32 %v1028, 7
      %v1031 = vsub.s32 0, %v1030
      %v1032 = vsel %vm1026, %v1031, %v1030
      %vm1033 = vcmp.lt.s32.totalorder %v1001, 0
      %v1034 = vsub.s32 0, %v1001
      %v1035 = vsel %vm1033, %v1034, %v1001
      %v1036 = vshrl.u32 %v1035, 3
      %v1037 = vand.u32 %v1035, 7
      %v1038 = vsub.s32 0, %v1037
      %v1039 = vsel %vm1033, %v1038, %v1037
      %vm1040 = vcmp.lt.s32.totalorder %v1002, 0
      %v1041 = vsub.s32 0, %v1002
      %v1042 = vsel %vm1040, %v1041, %v1002
      %v1043 = vshrl.u32 %v1042, 3
      %v1044 = vand.u32 %v1042, 7
      %v1045 = vsub.s32 0, %v1044
      %v1046 = vsel %vm1040, %v1045, %v1044
      %vm1047 = vcmp.lt.s32.totalorder %v1003, 0
      %v1048 = vsub.s32 0, %v1003
      %v1049 = vsel %vm1047, %v1048, %v1003
      %v1050 = vshrl.u32 %v1049, 3
      %v1051 = vand.u32 %v1049, 7
      %v1052 = vsub.s32 0, %v1051
      %v1053 = vsel %vm1047, %v1052, %v1051
      %vm1054 = vcmp.lt.s32.totalorder %v1004, 0
      %v1055 = vsub.s32 0, %v1004
      %v1056 = vsel %vm1054, %v1055, %v1004
      %v1057 = vshrl.u32 %v1056, 3
      %v1058 = vand.u32 %v1056, 7
      %v1059 = vsub.s32 0, %v1058
      %v1060 = vsel %vm1054, %v1059, %v1058
      %vm1061 = vcmp.ne.s32.totalorder %v1011, 0
      %vm1062 = vcmp.ne.s32.totalorder %v1018, 0
      %vm1063 = vcmp.ne.s32.totalorder %v1025, 0
      %vm1064 = vcmp.ne.s32.totalorder %v1032, 0
      %vm1065 = vcmp.ne.s32.totalorder %v1039, 0
      %vm1066 = vcmp.ne.s32.totalorder %v1046, 0
      %vm1067 = vcmp.ne.s32.totalorder %v1053, 0
      %vm1068 = vcmp.ne.s32.totalorder %v1060, 0
      %vm1069 = vcmp.lt.s32.totalorder %v1011, 0
      %vm1070 = vcmp.lt.s32.totalorder %v1018, 0
      %vm1071 = vcmp.lt.s32.totalorder %v1025, 0
      %vm1072 = vcmp.lt.s32.totalorder %v1032, 0
      %vm1073 = vcmp.lt.s32.totalorder %v1039, 0
      %vm1074 = vcmp.lt.s32.totalorder %v1046, 0
      %vm1075 = vcmp.lt.s32.totalorder %v1053, 0
      %vm1076 = vcmp.lt.s32.totalorder %v1060, 0
      %vm1077 = vmand %vm1069, %vm1061
      %vm1078 = vmand %vm1070, %vm1062
      %vm1079 = vmand %vm1071, %vm1063
      %vm1080 = vmand %vm1072, %vm1064
      %vm1081 = vmand %vm1073, %vm1065
      %vm1082 = vmand %vm1074, %vm1066
      %vm1083 = vmand %vm1075, %vm1067
      %vm1084 = vmand %vm1076, %vm1068
      %v1085 = vadd.s32 %v1011, 8
      %v1086 = vadd.s32 %v1018, 8
      %v1087 = vadd.s32 %v1025, 8
      %v1088 = vadd.s32 %v1032, 8
      %v1089 = vadd.s32 %v1039, 8
      %v1090 = vadd.s32 %v1046, 8
      %v1091 = vadd.s32 %v1053, 8
      %v1092 = vadd.s32 %v1060, 8
      %v1093 = vsel %vm1077, %v1085, %v1011
      %v1094 = vsel %vm1078, %v1086, %v1018
      %v1095 = vsel %vm1079, %v1087, %v1025
      %v1096 = vsel %vm1080, %v1088, %v1032
      %v1097 = vsel %vm1081, %v1089, %v1039
      %v1098 = vsel %vm1082, %v1090, %v1046
      %v1099 = vsel %vm1083, %v1091, %v1053
      %v1100 = vsel %vm1084, %v1092, %v1060
      %v1101 = vadd.s32 %v1093, 4294967295
      %v1102 = vadd.s32 %v1094, 4294967295
      %v1103 = vadd.s32 %v1095, 4294967295
      %v1104 = vadd.s32 %v1096, 4294967295
      %v1105 = vadd.s32 %v1097, 4294967295
      %v1106 = vadd.s32 %v1098, 4294967295
      %v1107 = vadd.s32 %v1099, 4294967295
      %v1108 = vadd.s32 %v1100, 4294967295
      %vm1109 = vcmp.ge.s32.totalorder %v1101, 0
      %vm1110 = vcmp.ge.s32.totalorder %v1102, 0
      %vm1111 = vcmp.ge.s32.totalorder %v1103, 0
      %vm1112 = vcmp.ge.s32.totalorder %v1104, 0
      %vm1113 = vcmp.ge.s32.totalorder %v1105, 0
      %vm1114 = vcmp.ge.s32.totalorder %v1106, 0
      %vm1115 = vcmp.ge.s32.totalorder %v1107, 0
      %vm1116 = vcmp.ge.s32.totalorder %v1108, 0
      %vm1117 = vcmp.lt.s32.totalorder %v1101, 8
      %vm1118 = vcmp.lt.s32.totalorder %v1102, 8
      %vm1119 = vcmp.lt.s32.totalorder %v1103, 8
      %vm1120 = vcmp.lt.s32.totalorder %v1104, 8
      %vm1121 = vcmp.lt.s32.totalorder %v1105, 8
      %vm1122 = vcmp.lt.s32.totalorder %v1106, 8
      %vm1123 = vcmp.lt.s32.totalorder %v1107, 8
      %vm1124 = vcmp.lt.s32.totalorder %v1108, 8
      %vm1125 = vmand %vm1109, %vm1117
      %vm1126 = vmand %vm1110, %vm1118
      %vm1127 = vmand %vm1111, %vm1119
      %vm1128 = vmand %vm1112, %vm1120
      %vm1129 = vmand %vm1113, %vm1121
      %vm1130 = vmand %vm1114, %vm1122
      %vm1131 = vmand %vm1115, %vm1123
      %vm1132 = vmand %vm1116, %vm1124
      %v1133 = vsel %vm1125, 1, 0
      %v1134 = vsel %vm1126, 1, 0
      %v1135 = vsel %vm1127, 1, 0
      %v1136 = vsel %vm1128, 1, 0
      %v1137 = vsel %vm1129, 1, 0
      %v1138 = vsel %vm1130, 1, 0
      %v1139 = vsel %vm1131, 1, 0
      %v1140 = vsel %vm1132, 1, 0
      %v1141 = vcvt.s32.f32 %v1133
      %v1142 = vcvt.s32.f32 %v1134
      %v1143 = vcvt.s32.f32 %v1135
      %v1144 = vcvt.s32.f32 %v1136
      %v1145 = vcvt.s32.f32 %v1137
      %v1146 = vcvt.s32.f32 %v1138
      %v1147 = vcvt.s32.f32 %v1139
      %v1148 = vcvt.s32.f32 %v1140
      %v1149 = vadd.s32 %v1093, 1
      %v1150 = vadd.s32 %v1094, 1
      %v1151 = vadd.s32 %v1095, 1
      %v1152 = vadd.s32 %v1096, 1
      %v1153 = vadd.s32 %v1097, 1
      %v1154 = vadd.s32 %v1098, 1
      %v1155 = vadd.s32 %v1099, 1
      %v1156 = vadd.s32 %v1100, 1
      %vm1157 = vcmp.ge.s32.totalorder %v1149, 0
      %vm1158 = vcmp.ge.s32.totalorder %v1150, 0
      %vm1159 = vcmp.ge.s32.totalorder %v1151, 0
      %vm1160 = vcmp.ge.s32.totalorder %v1152, 0
      %vm1161 = vcmp.ge.s32.totalorder %v1153, 0
      %vm1162 = vcmp.ge.s32.totalorder %v1154, 0
      %vm1163 = vcmp.ge.s32.totalorder %v1155, 0
      %vm1164 = vcmp.ge.s32.totalorder %v1156, 0
      %vm1165 = vcmp.lt.s32.totalorder %v1149, 8
      %vm1166 = vcmp.lt.s32.totalorder %v1150, 8
      %vm1167 = vcmp.lt.s32.totalorder %v1151, 8
      %vm1168 = vcmp.lt.s32.totalorder %v1152, 8
      %vm1169 = vcmp.lt.s32.totalorder %v1153, 8
      %vm1170 = vcmp.lt.s32.totalorder %v1154, 8
      %vm1171 = vcmp.lt.s32.totalorder %v1155, 8
      %vm1172 = vcmp.lt.s32.totalorder %v1156, 8
      %vm1173 = vmand %vm1157, %vm1165
      %vm1174 = vmand %vm1158, %vm1166
      %vm1175 = vmand %vm1159, %vm1167
      %vm1176 = vmand %vm1160, %vm1168
      %vm1177 = vmand %vm1161, %vm1169
      %vm1178 = vmand %vm1162, %vm1170
      %vm1179 = vmand %vm1163, %vm1171
      %vm1180 = vmand %vm1164, %vm1172
      %v1181 = vsel %vm1173, 1, 0
      %v1182 = vsel %vm1174, 1, 0
      %v1183 = vsel %vm1175, 1, 0
      %v1184 = vsel %vm1176, 1, 0
      %v1185 = vsel %vm1177, 1, 0
      %v1186 = vsel %vm1178, 1, 0
      %v1187 = vsel %vm1179, 1, 0
      %v1188 = vsel %vm1180, 1, 0
      %v1189 = vcvt.s32.f32 %v1181
      %v1190 = vcvt.s32.f32 %v1182
      %v1191 = vcvt.s32.f32 %v1183
      %v1192 = vcvt.s32.f32 %v1184
      %v1193 = vcvt.s32.f32 %v1185
      %v1194 = vcvt.s32.f32 %v1186
      %v1195 = vcvt.s32.f32 %v1187
      %v1196 = vcvt.s32.f32 %v1188
      %v1197 = vld [vmem:[%s987] sm:$0x8]
      %v1198 = vld [vmem:[%s987 + $0x4] sm:$0xf]
      %v1199 = vld [vmem:[%s987 + $0x8] sm:$0xf]
      %v1200 = vld [vmem:[%s987 + $0xc] sm:$0xf]
      %v1201 = vld [vmem:[%s987 + $0x10] sm:$0xf]
      %v1202 = vld [vmem:[%s987 + $0x14] sm:$0xf]
      %v1203 = vld [vmem:[%s987 + $0x18] sm:$0xf]
      %v1204 = vld [vmem:[%s987 + $0x1c] sm:$0xf]
      %v1205 = vld [vmem:[%s987 + $0x20] sm:$0xf]
      %v1206 = vld [vmem:[%s913 + $0x4] sm:$0x8]
      %v1207 = vld [vmem:[%s913 + $0x8] sm:$0xf]
      %v1208 = vld [vmem:[%s913 + $0xc] sm:$0xf]
      %v1209 = vld [vmem:[%s913 + $0x10] sm:$0xf]
      %v1210 = vld [vmem:[%s913 + $0x14] sm:$0xf]
      %v1211 = vld [vmem:[%s913 + $0x18] sm:$0xf]
      %v1212 = vld [vmem:[%s913 + $0x1c] sm:$0xf]
      %v1213 = vld [vmem:[%s913 + $0x20] sm:$0xf]
      %v1214 = vld [vmem:[%s913 + $0x24] sm:$0xf]
      %v1215 = vld [vmem:[%s987 + $0x4] sm:$0x8]
      %v1216 = vld [vmem:[%s987 + $0x24] sm:$0xf]
      %v1226 = vunpack.c.l.b16 %v1197
      %v1227 = vunpack.c.l.b16 %v1198
      %v1228 = vunpack.c.l.b16 %v1199
      %v1229 = vunpack.c.l.b16 %v1200
      %v1230 = vunpack.c.l.b16 %v1201
      %v1231 = vunpack.c.l.b16 %v1202
      %v1232 = vunpack.c.l.b16 %v1203
      %v1233 = vunpack.c.l.b16 %v1204
      %v1234 = vunpack.c.l.b16 %v1205
      %v1235 = vpack.c.b16 %v1227, %v1226
      %v1236 = vpack.c.b16 %v1229, %v1228
      %v1237 = vpack.c.b16 %v1231, %v1230
      %v1238 = vpack.c.b16 %v1233, %v1232
      %v1239 = vpack.c.b16 %v1234, %v1234
      %v1249 = vunpack.c.l.b16 %v1206
      %v1250 = vunpack.c.l.b16 %v1207
      %v1251 = vunpack.c.l.b16 %v1208
      %v1252 = vunpack.c.l.b16 %v1209
      %v1253 = vunpack.c.l.b16 %v1210
      %v1254 = vunpack.c.l.b16 %v1211
      %v1255 = vunpack.c.l.b16 %v1212
      %v1256 = vunpack.c.l.b16 %v1213
      %v1257 = vunpack.c.l.b16 %v1214
      %v1258 = vpack.c.b16 %v1250, %v1249
      %v1259 = vpack.c.b16 %v1252, %v1251
      %v1260 = vpack.c.b16 %v1254, %v1253
      %v1261 = vpack.c.b16 %v1256, %v1255
      %v1262 = vpack.c.b16 %v1257, %v1257
      %1263 = vrot.lane.b32.xlu0 %v1258, 8
      %v1264 = vpop.permute.xlu0 %1263
      %1265 = vrot.lane.b32.xlu0 %v1259, 8
      %v1266 = vpop.permute.xlu0 %1265
      %1267 = vrot.lane.b32.xlu0 %v1260, 8
      %v1268 = vpop.permute.xlu0 %1267
      %1269 = vrot.lane.b32.xlu0 %v1261, 8
      %v1270 = vpop.permute.xlu0 %1269
      %1271 = vrot.lane.b32.xlu0 %v1262, 8
      %v1272 = vpop.permute.xlu0 %1271
      %v1275 = vunpack.c.l.b16 %v1215
      %v1276 = vunpack.c.l.b16 %v1216
      %v1277 = vpack.c.b16 %v1228, %v1275
      %v1278 = vpack.c.b16 %v1230, %v1229
      %v1279 = vpack.c.b16 %v1232, %v1231
      %v1280 = vpack.c.b16 %v1234, %v1233
      %v1281 = vpack.c.b16 %v1276, %v1276
      %1282 = vrot.lane.b32.xlu0 %v1277, 16
      %v1283 = vpop.permute.xlu0 %1282
      %1284 = vrot.lane.b32.xlu0 %v1278, 16
      %v1285 = vpop.permute.xlu0 %1284
      %1286 = vrot.lane.b32.xlu0 %v1279, 16
      %v1287 = vpop.permute.xlu0 %1286
      %1288 = vrot.lane.b32.xlu0 %v1280, 16
      %v1289 = vpop.permute.xlu0 %1288
      %1290 = vrot.lane.b32.xlu0 %v1281, 16
      %v1291 = vpop.permute.xlu0 %1290
      %vm1292 = vcmask 64512
      %v1295 = vsel %vm1292, %v1235, %v1264
      %v1298 = vsel %vm1292, %v1236, %v1266
      %v1301 = vsel %vm1292, %v1237, %v1268
      %v1304 = vsel %vm1292, %v1238, %v1270
      %v1307 = vsel %vm1292, %v1239, %v1272
      %vm1308 = vcmask 130048
      %v1310 = vsel %vm1308, %v1295, %v1283
      %v1312 = vsel %vm1308, %v1298, %v1285
      %v1314 = vsel %vm1308, %v1301, %v1287
      %v1316 = vsel %vm1308, %v1304, %v1289
      %v1318 = vsel %vm1308, %v1307, %v1291
      %v1319 = vld [vmem:[%s4] sm:$0xf]
      %v1320 = vld [vmem:[%s4 + $0x4] sm:$0xf]
      %v1321 = vld [vmem:[%s4 + $0x8] sm:$0xf]
      %vm1322 = vsmask.f32 4352
      %v1323 = vshrl.u32 %v1310, 16
      %v1325 = vrot.slane %v1323, 3
      %v1326 = vshll.u32 %v1310, 16
      %v1328 = vrot.slane %v1326, 4
      %v1329 = vor.u32 %v1325, %v1328
      %v1330 = vshrl.u32 %v1312, 16
      %v1332 = vrot.slane %v1330, 3
      %v1333 = vshll.u32 %v1312, 16
      %v1335 = vrot.slane %v1333, 4
      %v1336 = vor.u32 %v1332, %v1335
      %v1337 = vsel %vm1322, %v1329, %v1336
      %v1338 = vshrl.u32 %v1314, 16
      %v1340 = vrot.slane %v1338, 3
      %v1341 = vshll.u32 %v1314, 16
      %v1343 = vrot.slane %v1341, 4
      %v1344 = vor.u32 %v1340, %v1343
      %v1345 = vsel %vm1322, %v1336, %v1344
      %v1346 = vshrl.u32 %v1316, 16
      %v1348 = vrot.slane %v1346, 3
      %v1349 = vshll.u32 %v1316, 16
      %v1351 = vrot.slane %v1349, 4
      %v1352 = vor.u32 %v1348, %v1351
      %v1353 = vsel %vm1322, %v1344, %v1352
      %v1354 = vshrl.u32 %v1318, 16
      %v1356 = vrot.slane %v1354, 3
      %v1357 = vshll.u32 %v1318, 16
      %v1359 = vrot.slane %v1357, 4
      %v1360 = vor.u32 %v1356, %v1359
      %v1361 = vsel %vm1322, %v1352, %v1360
      %v1365 = vunpack.c.l.b16 %v1319
      %v1366 = vunpack.c.l.b16 %v1320
      %v1367 = vunpack.c.l.b16 %v1321
      %v1368 = vpack.c.b16 %v1366, %v1365
      %v1369 = vpack.c.b16 %v1367, %v1367
      %vm1371 = vcmask 195584
      %v1373 = vsel %vm1371, %v1337, 0
      %v1376 = vsel %vm1371, %v1345, 0
      %v1379 = vsel %vm1371, %v1353, 0
      %v1382 = vsel %vm1371, %v1361, 0
      %vm1384 = vcmask 1043456
      %v1386 = vsel %vm1384, %v1369, 0
      %1388 = vmatprep.subr.bf16.mxu0 0
      %1389 = vmatpush1.bf16.msra.mxu0 0
      %1390 = vmatprep.subr.bf16.mxu0 0
      %1391 = vmatpush1.bf16.msra.mxu0 0
      %1392 = vmatprep.subr.bf16.mxu0 0
      %1393 = vmatpush1.bf16.msra.mxu0 0
      %1394 = vmatprep.subr.bf16.mxu0 0
      %1395 = vmatpush1.bf16.msra.mxu0 0
      %1396 = vmatprep.subr.bf16.mxu0 0
      %1397 = vmatpush1.bf16.msra.mxu0 0
      %1398 = vmatprep.subr.bf16.mxu0 0
      %1399 = vmatpush1.bf16.msra.mxu0 0
      %1400 = vmatprep.subr.bf16.mxu0 0
      %1401 = vmatpush1.bf16.msra.mxu0 %v1386
      %1402 = vmatprep.subr.bf16.mxu0 0
      %1403 = vmatpush1.bf16.msra.mxu0 %v1368
      %1404 = vmatprep.subr.bf16.mxu0 0
      %1405 = vmatpush2.bf16.msra.mxu0 0
      %1406 = vmatprep.subr.bf16.mxu0 0
      %1407 = vmatpush2.bf16.msra.mxu0 0
      %1408 = vmatprep.subr.bf16.mxu0 0
      %1409 = vmatpush2.bf16.msra.mxu0 0
      %1410 = vmatprep.subr.bf16.mxu0 0
      %1411 = vmatpush2.bf16.msra.mxu0 0
      %1412 = vmatprep.subr.bf16.mxu0 0
      %1413 = vmatpush2.bf16.msra.mxu0 0
      %1414 = vmatprep.subr.bf16.mxu0 0
      %1415 = vmatpush2.bf16.msra.mxu0 0
      %1416 = vmatprep.subr.bf16.mxu0 0
      %1417 = vmatpush2.bf16.msra.mxu0 0
      %1418 = vmatprep.subr.bf16.mxu0 0
      %1419 = vmatpush2.bf16.msra.mxu0 0
      %1420 = vmatprep.mubr.bf16.mxu0 0
      %1421 = vmatmul.mubr.bf16.gmra.mxu0 %v1373
      %v1422 = vpop.f32.mrf.mxu0
      %v1423 = vadd.f32 0.0, %v1422
      %v1424 = vpop.f32.mrf.mxu0
      %v1425 = vpop.f32.mrf.mxu0
      %v1426 = vadd.f32 0.0, %v1425
      %v1427 = vpop.f32.mrf.mxu0
      %1428 = vmatprep.mubr.bf16.mxu0 0
      %1429 = vmatmul.mubr.bf16.gmra.mxu0 %v1376
      %v1430 = vpop.f32.mrf.mxu0
      %v1431 = vadd.f32 0.0, %v1430
      %v1432 = vpop.f32.mrf.mxu0
      %v1433 = vpop.f32.mrf.mxu0
      %v1434 = vadd.f32 0.0, %v1433
      %v1435 = vpop.f32.mrf.mxu0
      %1436 = vmatprep.mubr.bf16.mxu0 0
      %1437 = vmatmul.mubr.bf16.gmra.mxu0 %v1379
      %v1438 = vpop.f32.mrf.mxu0
      %v1439 = vadd.f32 0.0, %v1438
      %v1440 = vpop.f32.mrf.mxu0
      %v1441 = vpop.f32.mrf.mxu0
      %v1442 = vadd.f32 0.0, %v1441
      %v1443 = vpop.f32.mrf.mxu0
      %1444 = vmatprep.mubr.bf16.mxu0 0
      %1445 = vmatmul.mubr.bf16.gmra.mxu0 %v1382
      %v1446 = vpop.f32.mrf.mxu0
      %v1447 = vadd.f32 0.0, %v1446
      %v1448 = vpop.f32.mrf.mxu0
      %v1449 = vpop.f32.mrf.mxu0
      %v1450 = vadd.f32 0.0, %v1449
      %v1451 = vpop.f32.mrf.mxu0
      %1452 = vdwg.mxu0
      %v1453 = vmul.f32 %v1423, %v1141
      %v1454 = vmul.f32 %v1426, %v1142
      %v1455 = vmul.f32 %v1431, %v1143
      %v1456 = vmul.f32 %v1434, %v1144
      %v1457 = vmul.f32 %v1439, %v1145
      %v1458 = vmul.f32 %v1442, %v1146
      %v1459 = vmul.f32 %v1447, %v1147
      %v1460 = vmul.f32 %v1450, %v1148
      %1461 = vst.msk [vmem:[#allocation4] sm:$0xff] %vm1308, %v1453
      %1462 = vst.msk [vmem:[#allocation4 + $0x8] sm:$0xff] %vm1308, %v1454
      %1463 = vst.msk [vmem:[#allocation4 + $0x10] sm:$0xff] %vm1308, %v1455
      %1464 = vst.msk [vmem:[#allocation4 + $0x18] sm:$0xff] %vm1308, %v1456
      %1465 = vst.msk [vmem:[#allocation4 + $0x20] sm:$0xff] %vm1308, %v1457
      %1466 = vst.msk [vmem:[#allocation4 + $0x28] sm:$0xff] %vm1308, %v1458
      %1467 = vst.msk [vmem:[#allocation4 + $0x30] sm:$0xff] %vm1308, %v1459
      %1468 = vst.msk [vmem:[#allocation4 + $0x38] sm:$0xff] %vm1308, %v1460
      %v1469 = vld [vmem:[%s950 + $0x4] sm:$0xf]
      %v1470 = vld [vmem:[%s950 + $0x8] sm:$0xf]
      %v1471 = vld [vmem:[%s950 + $0xc] sm:$0xf]
      %v1472 = vld [vmem:[%s950 + $0x10] sm:$0xf]
      %v1473 = vld [vmem:[%s950 + $0x14] sm:$0xf]
      %v1474 = vld [vmem:[%s950 + $0x18] sm:$0xf]
      %v1475 = vld [vmem:[%s950 + $0x1c] sm:$0xf]
      %v1476 = vld [vmem:[%s950 + $0x20] sm:$0xf]
      %v1477 = vld [vmem:[%s987 + $0x4] sm:$0xf]
      %v1478 = vld [vmem:[%s987 + $0x8] sm:$0xf]
      %v1479 = vld [vmem:[%s987 + $0xc] sm:$0xf]
      %v1480 = vld [vmem:[%s987 + $0x10] sm:$0xf]
      %v1481 = vld [vmem:[%s987 + $0x14] sm:$0xf]
      %v1482 = vld [vmem:[%s987 + $0x18] sm:$0xf]
      %v1483 = vld [vmem:[%s987 + $0x1c] sm:$0xf]
      %v1484 = vld [vmem:[%s987 + $0x20] sm:$0xf]
      %v1485 = vld [vmem:[#allocation2 + $0x8] sm:$0xf]
      %v1486 = vld [vmem:[#allocation2 + $0xc] sm:$0xf]
      %v1487 = vld [vmem:[#allocation2 + $0x10] sm:$0xf]
      %v1488 = vld [vmem:[#allocation2 + $0x14] sm:$0xf]
      %v1489 = vld [vmem:[#allocation2 + $0x18] sm:$0xf]
      %v1490 = vld [vmem:[#allocation2 + $0x1c] sm:$0xf]
      %v1491 = vld [vmem:[#allocation2 + $0x20] sm:$0xf]
      %v1492 = vld [vmem:[#allocation2 + $0x24] sm:$0xf]
      %v1493 = vld [vmem:[%s913 + $0x8] sm:$0xf]
      %v1494 = vld [vmem:[%s913 + $0xc] sm:$0xf]
      %v1495 = vld [vmem:[%s913 + $0x10] sm:$0xf]
      %v1496 = vld [vmem:[%s913 + $0x14] sm:$0xf]
      %v1497 = vld [vmem:[%s913 + $0x18] sm:$0xf]
      %v1498 = vld [vmem:[%s913 + $0x1c] sm:$0xf]
      %v1499 = vld [vmem:[%s913 + $0x20] sm:$0xf]
      %v1500 = vld [vmem:[%s913 + $0x24] sm:$0xf]
      %v1501 = vld [vmem:[%s950 + $0x24] sm:$0xf]
      %v1502 = vld [vmem:[%s987 + $0x24] sm:$0xf]
      %v1511 = vunpack.c.l.b16 %v1469
      %v1512 = vunpack.c.l.b16 %v1470
      %v1513 = vunpack.c.l.b16 %v1471
      %v1514 = vunpack.c.l.b16 %v1472
      %v1515 = vunpack.c.l.b16 %v1473
      %v1516 = vunpack.c.l.b16 %v1474
      %v1517 = vunpack.c.l.b16 %v1475
      %v1518 = vunpack.c.l.b16 %v1476
      %v1519 = vpack.c.b16 %v1512, %v1511
      %v1520 = vpack.c.b16 %v1514, %v1513
      %v1521 = vpack.c.b16 %v1516, %v1515
      %v1522 = vpack.c.b16 %v1518, %v1517
      %v1531 = vunpack.c.l.b16 %v1477
      %v1532 = vunpack.c.l.b16 %v1478
      %v1533 = vunpack.c.l.b16 %v1479
      %v1534 = vunpack.c.l.b16 %v1480
      %v1535 = vunpack.c.l.b16 %v1481
      %v1536 = vunpack.c.l.b16 %v1482
      %v1537 = vunpack.c.l.b16 %v1483
      %v1538 = vunpack.c.l.b16 %v1484
      %v1539 = vpack.c.b16 %v1532, %v1531
      %v1540 = vpack.c.b16 %v1534, %v1533
      %v1541 = vpack.c.b16 %v1536, %v1535
      %v1542 = vpack.c.b16 %v1538, %v1537
      %1543 = vrot.lane.b32.xlu0 %v1539, 8
      %v1544 = vpop.permute.xlu0 %1543
      %1545 = vrot.lane.b32.xlu0 %v1540, 8
      %v1546 = vpop.permute.xlu0 %1545
      %1547 = vrot.lane.b32.xlu0 %v1541, 8
      %v1548 = vpop.permute.xlu0 %1547
      %1549 = vrot.lane.b32.xlu0 %v1542, 8
      %v1550 = vpop.permute.xlu0 %1549
      %v1559 = vunpack.c.l.b16 %v1485
      %v1560 = vunpack.c.l.b16 %v1486
      %v1561 = vunpack.c.l.b16 %v1487
      %v1562 = vunpack.c.l.b16 %v1488
      %v1563 = vunpack.c.l.b16 %v1489
      %v1564 = vunpack.c.l.b16 %v1490
      %v1565 = vunpack.c.l.b16 %v1491
      %v1566 = vunpack.c.l.b16 %v1492
      %v1567 = vpack.c.b16 %v1560, %v1559
      %v1568 = vpack.c.b16 %v1562, %v1561
      %v1569 = vpack.c.b16 %v1564, %v1563
      %v1570 = vpack.c.b16 %v1566, %v1565
      %1571 = vrot.lane.b32.xlu0 %v1567, 16
      %v1572 = vpop.permute.xlu0 %1571
      %1573 = vrot.lane.b32.xlu0 %v1568, 16
      %v1574 = vpop.permute.xlu0 %1573
      %1575 = vrot.lane.b32.xlu0 %v1569, 16
      %v1576 = vpop.permute.xlu0 %1575
      %1577 = vrot.lane.b32.xlu0 %v1570, 16
      %v1578 = vpop.permute.xlu0 %1577
      %v1587 = vunpack.c.l.b16 %v1493
      %v1588 = vunpack.c.l.b16 %v1494
      %v1589 = vunpack.c.l.b16 %v1495
      %v1590 = vunpack.c.l.b16 %v1496
      %v1591 = vunpack.c.l.b16 %v1497
      %v1592 = vunpack.c.l.b16 %v1498
      %v1593 = vunpack.c.l.b16 %v1499
      %v1594 = vunpack.c.l.b16 %v1500
      %v1595 = vpack.c.b16 %v1588, %v1587
      %v1596 = vpack.c.b16 %v1590, %v1589
      %v1597 = vpack.c.b16 %v1592, %v1591
      %v1598 = vpack.c.b16 %v1594, %v1593
      %1599 = vrot.lane.b32.xlu0 %v1595, 24
      %v1600 = vpop.permute.xlu0 %1599
      %1601 = vrot.lane.b32.xlu0 %v1596, 24
      %v1602 = vpop.permute.xlu0 %1601
      %1603 = vrot.lane.b32.xlu0 %v1597, 24
      %v1604 = vpop.permute.xlu0 %1603
      %1605 = vrot.lane.b32.xlu0 %v1598, 24
      %v1606 = vpop.permute.xlu0 %1605
      %v1608 = vunpack.c.l.b16 %v1501
      %v1609 = vpack.c.b16 %v1513, %v1512
      %v1610 = vpack.c.b16 %v1515, %v1514
      %v1611 = vpack.c.b16 %v1517, %v1516
      %v1612 = vpack.c.b16 %v1608, %v1518
      %1613 = vrot.lane.b32.xlu0 %v1609, 32
      %v1614 = vpop.permute.xlu0 %1613
      %1615 = vrot.lane.b32.xlu0 %v1610, 32
      %v1616 = vpop.permute.xlu0 %1615
      %1617 = vrot.lane.b32.xlu0 %v1611, 32
      %v1618 = vpop.permute.xlu0 %1617
      %1619 = vrot.lane.b32.xlu0 %v1612, 32
      %v1620 = vpop.permute.xlu0 %1619
      %v1622 = vunpack.c.l.b16 %v1502
      %v1623 = vpack.c.b16 %v1533, %v1532
      %v1624 = vpack.c.b16 %v1535, %v1534
      %v1625 = vpack.c.b16 %v1537, %v1536
      %v1626 = vpack.c.b16 %v1622, %v1538
      %1627 = vrot.lane.b32.xlu0 %v1623, 40
      %v1628 = vpop.permute.xlu0 %1627
      %1629 = vrot.lane.b32.xlu0 %v1624, 40
      %v1630 = vpop.permute.xlu0 %1629
      %1631 = vrot.lane.b32.xlu0 %v1625, 40
      %v1632 = vpop.permute.xlu0 %1631
      %1633 = vrot.lane.b32.xlu0 %v1626, 40
      %v1634 = vpop.permute.xlu0 %1633
      %v1637 = vsel %vm1292, %v1519, %v1544
      %v1640 = vsel %vm1292, %v1520, %v1546
      %v1643 = vsel %vm1292, %v1521, %v1548
      %v1646 = vsel %vm1292, %v1522, %v1550
      %v1648 = vsel %vm1308, %v1637, %v1572
      %v1650 = vsel %vm1308, %v1640, %v1574
      %v1652 = vsel %vm1308, %v1643, %v1576
      %v1654 = vsel %vm1308, %v1646, %v1578
      %v1656 = vsel %vm1371, %v1648, %v1600
      %v1658 = vsel %vm1371, %v1650, %v1602
      %v1660 = vsel %vm1371, %v1652, %v1604
      %v1662 = vsel %vm1371, %v1654, %v1606
      %vm1663 = vcmask 261120
      %v1665 = vsel %vm1663, %v1656, %v1614
      %v1667 = vsel %vm1663, %v1658, %v1616
      %v1669 = vsel %vm1663, %v1660, %v1618
      %v1671 = vsel %vm1663, %v1662, %v1620
      %vm1672 = vcmask 326656
      %v1674 = vsel %vm1672, %v1665, %v1628
      %v1676 = vsel %vm1672, %v1667, %v1630
      %v1678 = vsel %vm1672, %v1669, %v1632
      %v1680 = vsel %vm1672, %v1671, %v1634
      %v1681 = vld [vmem:[%s4 + $0xc] sm:$0xf]
      %v1682 = vld [vmem:[%s4 + $0x10] sm:$0xf]
      %v1683 = vld [vmem:[%s4 + $0x14] sm:$0xf]
      %v1684 = vld [vmem:[%s4 + $0x18] sm:$0xf]
      %v1685 = vld [vmem:[%s4 + $0x1c] sm:$0xf]
      %v1686 = vld [vmem:[%s4 + $0x20] sm:$0xf]
      %v1693 = vunpack.c.l.b16 %v1681
      %v1694 = vunpack.c.l.b16 %v1682
      %v1695 = vunpack.c.l.b16 %v1683
      %v1696 = vunpack.c.l.b16 %v1684
      %v1697 = vunpack.c.l.b16 %v1685
      %v1698 = vunpack.c.l.b16 %v1686
      %v1699 = vpack.c.b16 %v1694, %v1693
      %v1700 = vpack.c.b16 %v1696, %v1695
      %v1701 = vpack.c.b16 %v1698, %v1697
      %vm1705 = vcmask 392192
      %v1706 = vsel %vm1705, %v1674, 0
      %v1708 = vsel %vm1705, %v1676, 0
      %v1710 = vsel %vm1705, %v1678, 0
      %v1712 = vsel %vm1705, %v1680, 0
      %1714 = vmatprep.subr.bf16.mxu0 0
      %1715 = vmatpush1.bf16.msra.mxu0 0
      %1716 = vmatprep.subr.bf16.mxu0 0
      %1717 = vmatpush1.bf16.msra.mxu0 0
      %1718 = vmatprep.subr.bf16.mxu0 0
      %1719 = vmatpush1.bf16.msra.mxu0 0
      %1720 = vmatprep.subr.bf16.mxu0 0
      %1721 = vmatpush1.bf16.msra.mxu0 0
      %1722 = vmatprep.subr.bf16.mxu0 0
      %1723 = vmatpush1.bf16.msra.mxu0 0
      %1724 = vmatprep.subr.bf16.mxu0 0
      %1725 = vmatpush1.bf16.msra.mxu0 %v1701
      %1726 = vmatprep.subr.bf16.mxu0 0
      %1727 = vmatpush1.bf16.msra.mxu0 %v1700
      %1728 = vmatprep.subr.bf16.mxu0 0
      %1729 = vmatpush1.bf16.msra.mxu0 %v1699
      %1730 = vmatprep.subr.bf16.mxu0 0
      %1731 = vmatpush2.bf16.msra.mxu0 0
      %1732 = vmatprep.subr.bf16.mxu0 0
      %1733 = vmatpush2.bf16.msra.mxu0 0
      %1734 = vmatprep.subr.bf16.mxu0 0
      %1735 = vmatpush2.bf16.msra.mxu0 0
      %1736 = vmatprep.subr.bf16.mxu0 0
      %1737 = vmatpush2.bf16.msra.mxu0 0
      %1738 = vmatprep.subr.bf16.mxu0 0
      %1739 = vmatpush2.bf16.msra.mxu0 0
      %1740 = vmatprep.subr.bf16.mxu0 0
      %1741 = vmatpush2.bf16.msra.mxu0 0
      %1742 = vmatprep.subr.bf16.mxu0 0
      %1743 = vmatpush2.bf16.msra.mxu0 0
      %1744 = vmatprep.subr.bf16.mxu0 0
      %1745 = vmatpush2.bf16.msra.mxu0 0
      %1746 = vmatprep.mubr.bf16.mxu0 0
      %1747 = vmatmul.mubr.bf16.gmra.mxu0 %v1706
      %v1748 = vpop.f32.mrf.mxu0
      %v1749 = vadd.f32 0.0, %v1748
      %v1750 = vpop.f32.mrf.mxu0
      %v1751 = vpop.f32.mrf.mxu0
      %v1752 = vadd.f32 0.0, %v1751
      %v1753 = vpop.f32.mrf.mxu0
      %1754 = vmatprep.mubr.bf16.mxu0 0
      %1755 = vmatmul.mubr.bf16.gmra.mxu0 %v1708
      %v1756 = vpop.f32.mrf.mxu0
      %v1757 = vadd.f32 0.0, %v1756
      %v1758 = vpop.f32.mrf.mxu0
      %v1759 = vpop.f32.mrf.mxu0
      %v1760 = vadd.f32 0.0, %v1759
      %v1761 = vpop.f32.mrf.mxu0
      %1762 = vmatprep.mubr.bf16.mxu0 0
      %1763 = vmatmul.mubr.bf16.gmra.mxu0 %v1710
      %v1764 = vpop.f32.mrf.mxu0
      %v1765 = vadd.f32 0.0, %v1764
      %v1766 = vpop.f32.mrf.mxu0
      %v1767 = vpop.f32.mrf.mxu0
      %v1768 = vadd.f32 0.0, %v1767
      %v1769 = vpop.f32.mrf.mxu0
      %1770 = vmatprep.mubr.bf16.mxu0 0
      %1771 = vmatmul.mubr.bf16.gmra.mxu0 %v1712
      %v1772 = vpop.f32.mrf.mxu0
      %v1773 = vadd.f32 0.0, %v1772
      %v1774 = vpop.f32.mrf.mxu0
      %v1775 = vpop.f32.mrf.mxu0
      %v1776 = vadd.f32 0.0, %v1775
      %v1777 = vpop.f32.mrf.mxu0
      %1778 = vdwg.mxu0
      %v1779 = vld [vmem:[#allocation4] sm:$0xff]
      %v1780 = vld [vmem:[#allocation4 + $0x8] sm:$0xff]
      %v1781 = vld [vmem:[#allocation4 + $0x10] sm:$0xff]
      %v1782 = vld [vmem:[#allocation4 + $0x18] sm:$0xff]
      %v1783 = vld [vmem:[#allocation4 + $0x20] sm:$0xff]
      %v1784 = vld [vmem:[#allocation4 + $0x28] sm:$0xff]
      %v1785 = vld [vmem:[#allocation4 + $0x30] sm:$0xff]
      %v1786 = vld [vmem:[#allocation4 + $0x38] sm:$0xff]
      %v1787 = vadd.f32 %v1779, %v1749
      %v1788 = vadd.f32 %v1780, %v1752
      %v1789 = vadd.f32 %v1781, %v1757
      %v1790 = vadd.f32 %v1782, %v1760
      %v1791 = vadd.f32 %v1783, %v1765
      %v1792 = vadd.f32 %v1784, %v1768
      %v1793 = vadd.f32 %v1785, %v1773
      %v1794 = vadd.f32 %v1786, %v1776
      %1795 = vst.msk [vmem:[#allocation4] sm:$0xff] %vm1308, %v1787
      %1796 = vst.msk [vmem:[#allocation4 + $0x8] sm:$0xff] %vm1308, %v1788
      %1797 = vst.msk [vmem:[#allocation4 + $0x10] sm:$0xff] %vm1308, %v1789
      %1798 = vst.msk [vmem:[#allocation4 + $0x18] sm:$0xff] %vm1308, %v1790
      %1799 = vst.msk [vmem:[#allocation4 + $0x20] sm:$0xff] %vm1308, %v1791
      %1800 = vst.msk [vmem:[#allocation4 + $0x28] sm:$0xff] %vm1308, %v1792
      %1801 = vst.msk [vmem:[#allocation4 + $0x30] sm:$0xff] %vm1308, %v1793
      %1802 = vst.msk [vmem:[#allocation4 + $0x38] sm:$0xff] %vm1308, %v1794
      %v1803 = vld [vmem:[#allocation4] sm:$0xff]
      %v1804 = vld [vmem:[#allocation4 + $0x8] sm:$0xff]
      %v1805 = vld [vmem:[#allocation4 + $0x10] sm:$0xff]
      %v1806 = vld [vmem:[#allocation4 + $0x18] sm:$0xff]
      %v1807 = vld [vmem:[#allocation4 + $0x20] sm:$0xff]
      %v1808 = vld [vmem:[#allocation4 + $0x28] sm:$0xff]
      %v1809 = vld [vmem:[#allocation4 + $0x30] sm:$0xff]
      %v1810 = vld [vmem:[#allocation4 + $0x38] sm:$0xff]
      %v1811 = vld [vmem:[%s5] sm:$0x1]
      %v1813 = vlaneseq
      %v1814 = vshrl.u32 %v1813, 7
      %v1815 = vsub.s32 0, %v1814
      %v1816 = vrot.slane %v1811, %v1815
      %v1818 = vmul.f32 %v1803, %v1816
      %v1819 = vmul.f32 %v1804, %v1816
      %v1820 = vmul.f32 %v1805, %v1816
      %v1821 = vmul.f32 %v1806, %v1816
      %v1822 = vmul.f32 %v1807, %v1816
      %v1823 = vmul.f32 %v1808, %v1816
      %v1824 = vmul.f32 %v1809, %v1816
      %v1825 = vmul.f32 %v1810, %v1816
      %v1826 = vld [vmem:[%s6] sm:$0x1]
      %v1828 = vlaneseq
      %v1829 = vshrl.u32 %v1828, 7
      %v1830 = vsub.s32 0, %v1829
      %v1831 = vrot.slane %v1826, %v1830
      %v1833 = vadd.f32 %v1818, %v1831
      %v1834 = vadd.f32 %v1819, %v1831
      %v1835 = vadd.f32 %v1820, %v1831
      %v1836 = vadd.f32 %v1821, %v1831
      %v1837 = vadd.f32 %v1822, %v1831
      %v1838 = vadd.f32 %v1823, %v1831
      %v1839 = vadd.f32 %v1824, %v1831
      %v1840 = vadd.f32 %v1825, %v1831
      %v1841 = vmax.f32 %v1833, 0.0
      %v1842 = vmax.f32 %v1834, 0.0
      %v1843 = vmax.f32 %v1835, 0.0
      %v1844 = vmax.f32 %v1836, 0.0
      %v1845 = vmax.f32 %v1837, 0.0
      %v1846 = vmax.f32 %v1838, 0.0
      %v1847 = vmax.f32 %v1839, 0.0
      %v1848 = vmax.f32 %v1840, 0.0
      %1849 = vst.msk [vmem:[%s367] sm:$0xff] %vm1308, %v1841
      %1850 = vst.msk [vmem:[%s367 + $0x8] sm:$0xff] %vm1308, %v1842
      %1851 = vst.msk [vmem:[%s367 + $0x10] sm:$0xff] %vm1308, %v1843
      %1852 = vst.msk [vmem:[%s367 + $0x18] sm:$0xff] %vm1308, %v1844
      %1853 = vst.msk [vmem:[%s367 + $0x20] sm:$0xff] %vm1308, %v1845
      %1854 = vst.msk [vmem:[%s367 + $0x28] sm:$0xff] %vm1308, %v1846
      %1855 = vst.msk [vmem:[%s367 + $0x30] sm:$0xff] %vm1308, %v1847
      %1856 = vst.msk [vmem:[%s367 + $0x38] sm:$0xff] %vm1308, %v1848
      %v1857 = vpack.c.bf16 %v1842, %v1841
      %v1858 = vpack.c.bf16 %v1844, %v1843
      %v1859 = vpack.c.bf16 %v1846, %v1845
      %v1860 = vpack.c.bf16 %v1848, %v1847
      %v1865 = vunpack.c.l.b16 %v1857
      %v1866 = vunpack.c.h.b16 %v1857
      %v1867 = vunpack.c.l.b16 %v1858
      %v1868 = vunpack.c.h.b16 %v1858
      %v1869 = vunpack.c.l.b16 %v1859
      %v1870 = vunpack.c.h.b16 %v1859
      %v1871 = vunpack.c.l.b16 %v1860
      %v1872 = vunpack.c.h.b16 %v1860
      %v1873 = vpack.c.b16 %v1865, %v1865
      %v1874 = vpack.c.b16 %v1866, %v1866
      %v1875 = vpack.c.b16 %v1867, %v1867
      %v1876 = vpack.c.b16 %v1868, %v1868
      %v1877 = vpack.c.b16 %v1869, %v1869
      %v1878 = vpack.c.b16 %v1870, %v1870
      %v1879 = vpack.c.b16 %v1871, %v1871
      %v1880 = vpack.c.b16 %v1872, %v1872
      %1889 = vst.msk [vmem:[#allocation3 + $0x8] sm:$0xf] %vm391, %v1873
      %1890 = vst.msk [vmem:[#allocation3 + $0xc] sm:$0xf] %vm391, %v1874
      %1891 = vst.msk [vmem:[#allocation3 + $0x10] sm:$0xf] %vm391, %v1875
      %1892 = vst.msk [vmem:[#allocation3 + $0x14] sm:$0xf] %vm391, %v1876
      %1893 = vst.msk [vmem:[#allocation3 + $0x18] sm:$0xf] %vm391, %v1877
      %1894 = vst.msk [vmem:[#allocation3 + $0x1c] sm:$0xf] %vm391, %v1878
      %1895 = vst.msk [vmem:[#allocation3 + $0x20] sm:$0xf] %vm391, %v1879
      %1896 = vst.msk [vmem:[#allocation3 + $0x24] sm:$0xf] %vm391, %v1880
      %v1897 = vld [vmem:[#allocation3] sm:$0x8]
      %v1898 = vld [vmem:[#allocation3 + $0x4] sm:$0xf]
      %v1899 = vld [vmem:[#allocation3 + $0x8] sm:$0xf]
      %v1900 = vld [vmem:[#allocation3 + $0xc] sm:$0xf]
      %v1901 = vld [vmem:[#allocation3 + $0x10] sm:$0xf]
      %v1902 = vld [vmem:[#allocation3 + $0x14] sm:$0xf]
      %v1903 = vld [vmem:[#allocation3 + $0x18] sm:$0xf]
      %v1904 = vld [vmem:[#allocation3 + $0x1c] sm:$0xf]
      %v1905 = vld [vmem:[#allocation3 + $0x20] sm:$0xf]
      %v1906 = vld [vmem:[#allocation3 + $0x4] sm:$0x8]
      %v1907 = vld [vmem:[#allocation3 + $0x24] sm:$0xf]
      %v1908 = vld [vmem:[#allocation3 + $0x8] sm:$0x8]
      %v1909 = vld [vmem:[#allocation3 + $0x28] sm:$0xf]
      %v1919 = vunpack.c.l.b16 %v1897
      %v1920 = vunpack.c.l.b16 %v1898
      %v1921 = vunpack.c.l.b16 %v1899
      %v1922 = vunpack.c.l.b16 %v1900
      %v1923 = vunpack.c.l.b16 %v1901
      %v1924 = vunpack.c.l.b16 %v1902
      %v1925 = vunpack.c.l.b16 %v1903
      %v1926 = vunpack.c.l.b16 %v1904
      %v1927 = vunpack.c.l.b16 %v1905
      %v1928 = vpack.c.b16 %v1920, %v1919
      %v1929 = vpack.c.b16 %v1922, %v1921
      %v1930 = vpack.c.b16 %v1924, %v1923
      %v1931 = vpack.c.b16 %v1926, %v1925
      %v1932 = vpack.c.b16 %v1927, %v1927
      %v1935 = vunpack.c.l.b16 %v1906
      %v1936 = vunpack.c.l.b16 %v1907
      %v1937 = vpack.c.b16 %v1921, %v1935
      %v1938 = vpack.c.b16 %v1923, %v1922
      %v1939 = vpack.c.b16 %v1925, %v1924
      %v1940 = vpack.c.b16 %v1927, %v1926
      %v1941 = vpack.c.b16 %v1936, %v1936
      %1942 = vrot.lane.b32.xlu0 %v1937, 16
      %v1943 = vpop.permute.xlu0 %1942
      %1944 = vrot.lane.b32.xlu0 %v1938, 16
      %v1945 = vpop.permute.xlu0 %1944
      %1946 = vrot.lane.b32.xlu0 %v1939, 16
      %v1947 = vpop.permute.xlu0 %1946
      %1948 = vrot.lane.b32.xlu0 %v1940, 16
      %v1949 = vpop.permute.xlu0 %1948
      %1950 = vrot.lane.b32.xlu0 %v1941, 16
      %v1951 = vpop.permute.xlu0 %1950
      %v1954 = vunpack.c.l.b16 %v1908
      %v1955 = vunpack.c.l.b16 %v1909
      %v1956 = vpack.c.b16 %v1922, %v1954
      %v1957 = vpack.c.b16 %v1936, %v1927
      %v1958 = vpack.c.b16 %v1955, %v1955
      %1959 = vrot.lane.b32.xlu0 %v1956, 32
      %v1960 = vpop.permute.xlu0 %1959
      %1961 = vrot.lane.b32.xlu0 %v1930, 32
      %v1962 = vpop.permute.xlu0 %1961
      %1963 = vrot.lane.b32.xlu0 %v1931, 32
      %v1964 = vpop.permute.xlu0 %1963
      %1965 = vrot.lane.b32.xlu0 %v1957, 32
      %v1966 = vpop.permute.xlu0 %1965
      %1967 = vrot.lane.b32.xlu0 %v1958, 32
      %v1968 = vpop.permute.xlu0 %1967
      %v1971 = vsel %vm1308, %v1928, %v1943
      %v1974 = vsel %vm1308, %v1929, %v1945
      %v1977 = vsel %vm1308, %v1930, %v1947
      %v1980 = vsel %vm1308, %v1931, %v1949
      %v1983 = vsel %vm1308, %v1932, %v1951
      %v1985 = vsel %vm1663, %v1971, %v1960
      %v1987 = vsel %vm1663, %v1974, %v1962
      %v1989 = vsel %vm1663, %v1977, %v1964
      %v1991 = vsel %vm1663, %v1980, %v1966
      %v1993 = vsel %vm1663, %v1983, %v1968
      %v1994 = vld [vmem:[%s7] sm:$0xf]
      %v1995 = vld [vmem:[%s7 + $0x4] sm:$0xf]
      %v1996 = vld [vmem:[%s7 + $0x8] sm:$0xf]
      %v1997 = vld [vmem:[%s7 + $0xc] sm:$0xf]
      %v1998 = vld [vmem:[%s7 + $0x10] sm:$0xf]
      %v1999 = vld [vmem:[%s7 + $0x14] sm:$0xf]
      %v2000 = vshrl.u32 %v1985, 16
      %v2002 = vrot.slane %v2000, 3
      %v2003 = vshll.u32 %v1985, 16
      %v2005 = vrot.slane %v2003, 4
      %v2006 = vor.u32 %v2002, %v2005
      %v2007 = vshrl.u32 %v1987, 16
      %v2009 = vrot.slane %v2007, 3
      %v2010 = vshll.u32 %v1987, 16
      %v2012 = vrot.slane %v2010, 4
      %v2013 = vor.u32 %v2009, %v2012
      %v2014 = vsel %vm1322, %v2006, %v2013
      %v2015 = vshrl.u32 %v1989, 16
      %v2017 = vrot.slane %v2015, 3
      %v2018 = vshll.u32 %v1989, 16
      %v2020 = vrot.slane %v2018, 4
      %v2021 = vor.u32 %v2017, %v2020
      %v2022 = vsel %vm1322, %v2013, %v2021
      %v2023 = vshrl.u32 %v1991, 16
      %v2025 = vrot.slane %v2023, 3
      %v2026 = vshll.u32 %v1991, 16
      %v2028 = vrot.slane %v2026, 4
      %v2029 = vor.u32 %v2025, %v2028
      %v2030 = vsel %vm1322, %v2021, %v2029
      %v2031 = vshrl.u32 %v1993, 16
      %v2033 = vrot.slane %v2031, 3
      %v2034 = vshll.u32 %v1993, 16
      %v2036 = vrot.slane %v2034, 4
      %v2037 = vor.u32 %v2033, %v2036
      %v2038 = vsel %vm1322, %v2029, %v2037
      %v2045 = vunpack.c.l.b16 %v1994
      %v2046 = vunpack.c.l.b16 %v1995
      %v2047 = vunpack.c.l.b16 %v1996
      %v2048 = vunpack.c.l.b16 %v1997
      %v2049 = vunpack.c.l.b16 %v1998
      %v2050 = vunpack.c.l.b16 %v1999
      %v2051 = vpack.c.b16 %v2046, %v2045
      %v2052 = vpack.c.b16 %v2048, %v2047
      %v2053 = vpack.c.b16 %v2050, %v2049
      %v2058 = vsel %vm1705, %v2014, 0
      %v2061 = vsel %vm1705, %v2022, 0
      %v2064 = vsel %vm1705, %v2030, 0
      %v2067 = vsel %vm1705, %v2038, 0
      %2069 = vmatprep.subr.bf16.mxu0 0
      %2070 = vmatpush1.bf16.msra.mxu0 0
      %2071 = vmatprep.subr.bf16.mxu0 0
      %2072 = vmatpush1.bf16.msra.mxu0 0
      %2073 = vmatprep.subr.bf16.mxu0 0
      %2074 = vmatpush1.bf16.msra.mxu0 0
      %2075 = vmatprep.subr.bf16.mxu0 0
      %2076 = vmatpush1.bf16.msra.mxu0 0
      %2077 = vmatprep.subr.bf16.mxu0 0
      %2078 = vmatpush1.bf16.msra.mxu0 0
      %2079 = vmatprep.subr.bf16.mxu0 0
      %2080 = vmatpush1.bf16.msra.mxu0 %v2053
      %2081 = vmatprep.subr.bf16.mxu0 0
      %2082 = vmatpush1.bf16.msra.mxu0 %v2052
      %2083 = vmatprep.subr.bf16.mxu0 0
      %2084 = vmatpush1.bf16.msra.mxu0 %v2051
      %2085 = vmatprep.subr.bf16.mxu0 0
      %2086 = vmatpush2.bf16.msra.mxu0 0
      %2087 = vmatprep.subr.bf16.mxu0 0
      %2088 = vmatpush2.bf16.msra.mxu0 0
      %2089 = vmatprep.subr.bf16.mxu0 0
      %2090 = vmatpush2.bf16.msra.mxu0 0
      %2091 = vmatprep.subr.bf16.mxu0 0
      %2092 = vmatpush2.bf16.msra.mxu0 0
      %2093 = vmatprep.subr.bf16.mxu0 0
      %2094 = vmatpush2.bf16.msra.mxu0 0
      %2095 = vmatprep.subr.bf16.mxu0 0
      %2096 = vmatpush2.bf16.msra.mxu0 0
      %2097 = vmatprep.subr.bf16.mxu0 0
      %2098 = vmatpush2.bf16.msra.mxu0 0
      %2099 = vmatprep.subr.bf16.mxu0 0
      %2100 = vmatpush2.bf16.msra.mxu0 0
      %2101 = vmatprep.mubr.bf16.mxu0 0
      %2102 = vmatmul.mubr.bf16.gmra.mxu0 %v2058
      %v2103 = vpop.f32.mrf.mxu0
      %v2104 = vadd.f32 0.0, %v2103
      %v2105 = vpop.f32.mrf.mxu0
      %v2106 = vpop.f32.mrf.mxu0
      %v2107 = vadd.f32 0.0, %v2106
      %v2108 = vpop.f32.mrf.mxu0
      %2109 = vmatprep.mubr.bf16.mxu0 0
      %2110 = vmatmul.mubr.bf16.gmra.mxu0 %v2061
      %v2111 = vpop.f32.mrf.mxu0
      %v2112 = vadd.f32 0.0, %v2111
      %v2113 = vpop.f32.mrf.mxu0
      %v2114 = vpop.f32.mrf.mxu0
      %v2115 = vadd.f32 0.0, %v2114
      %v2116 = vpop.f32.mrf.mxu0
      %2117 = vmatprep.mubr.bf16.mxu0 0
      %2118 = vmatmul.mubr.bf16.gmra.mxu0 %v2064
      %v2119 = vpop.f32.mrf.mxu0
      %v2120 = vadd.f32 0.0, %v2119
      %v2121 = vpop.f32.mrf.mxu0
      %v2122 = vpop.f32.mrf.mxu0
      %v2123 = vadd.f32 0.0, %v2122
      %v2124 = vpop.f32.mrf.mxu0
      %2125 = vmatprep.mubr.bf16.mxu0 0
      %2126 = vmatmul.mubr.bf16.gmra.mxu0 %v2067
      %v2127 = vpop.f32.mrf.mxu0
      %v2128 = vadd.f32 0.0, %v2127
      %v2129 = vpop.f32.mrf.mxu0
      %v2130 = vpop.f32.mrf.mxu0
      %v2131 = vadd.f32 0.0, %v2130
      %v2132 = vpop.f32.mrf.mxu0
      %2133 = vdwg.mxu0
      %v2134 = vmul.f32 %v2104, %v1141
      %v2135 = vmul.f32 %v2107, %v1142
      %v2136 = vmul.f32 %v2112, %v1143
      %v2137 = vmul.f32 %v2115, %v1144
      %v2138 = vmul.f32 %v2120, %v1145
      %v2139 = vmul.f32 %v2123, %v1146
      %v2140 = vmul.f32 %v2128, %v1147
      %v2141 = vmul.f32 %v2131, %v1148
      %vm2142 = vcmask 228352
      %2143 = vst.msk [vmem:[#allocation5] sm:$0xff] %vm2142, %v2134
      %2144 = vst.msk [vmem:[#allocation5 + $0x8] sm:$0xff] %vm2142, %v2135
      %2145 = vst.msk [vmem:[#allocation5 + $0x10] sm:$0xff] %vm2142, %v2136
      %2146 = vst.msk [vmem:[#allocation5 + $0x18] sm:$0xff] %vm2142, %v2137
      %2147 = vst.msk [vmem:[#allocation5 + $0x20] sm:$0xff] %vm2142, %v2138
      %2148 = vst.msk [vmem:[#allocation5 + $0x28] sm:$0xff] %vm2142, %v2139
      %2149 = vst.msk [vmem:[#allocation5 + $0x30] sm:$0xff] %vm2142, %v2140
      %2150 = vst.msk [vmem:[#allocation5 + $0x38] sm:$0xff] %vm2142, %v2141
      %v2151 = vld [vmem:[#allocation3 + $0x4] sm:$0xf]
      %v2152 = vld [vmem:[#allocation3 + $0x8] sm:$0xf]
      %v2153 = vld [vmem:[#allocation3 + $0xc] sm:$0xf]
      %v2154 = vld [vmem:[#allocation3 + $0x10] sm:$0xf]
      %v2155 = vld [vmem:[#allocation3 + $0x14] sm:$0xf]
      %v2156 = vld [vmem:[#allocation3 + $0x18] sm:$0xf]
      %v2157 = vld [vmem:[#allocation3 + $0x1c] sm:$0xf]
      %v2158 = vld [vmem:[#allocation3 + $0x20] sm:$0xf]
      %v2159 = vld [vmem:[#allocation3 + $0x24] sm:$0xf]
      %v2160 = vld [vmem:[#allocation3 + $0x28] sm:$0xf]
      %v2169 = vunpack.c.l.b16 %v2151
      %v2170 = vunpack.c.l.b16 %v2152
      %v2171 = vunpack.c.l.b16 %v2153
      %v2172 = vunpack.c.l.b16 %v2154
      %v2173 = vunpack.c.l.b16 %v2155
      %v2174 = vunpack.c.l.b16 %v2156
      %v2175 = vunpack.c.l.b16 %v2157
      %v2176 = vunpack.c.l.b16 %v2158
      %v2177 = vpack.c.b16 %v2170, %v2169
      %v2178 = vpack.c.b16 %v2172, %v2171
      %v2179 = vpack.c.b16 %v2174, %v2173
      %v2180 = vpack.c.b16 %v2176, %v2175
      %v2182 = vunpack.c.l.b16 %v2159
      %v2183 = vpack.c.b16 %v2171, %v2170
      %v2184 = vpack.c.b16 %v2173, %v2172
      %v2185 = vpack.c.b16 %v2175, %v2174
      %v2186 = vpack.c.b16 %v2182, %v2176
      %2187 = vrot.lane.b32.xlu0 %v2183, 16
      %v2188 = vpop.permute.xlu0 %2187
      %2189 = vrot.lane.b32.xlu0 %v2184, 16
      %v2190 = vpop.permute.xlu0 %2189
      %2191 = vrot.lane.b32.xlu0 %v2185, 16
      %v2192 = vpop.permute.xlu0 %2191
      %2193 = vrot.lane.b32.xlu0 %v2186, 16
      %v2194 = vpop.permute.xlu0 %2193
      %v2196 = vunpack.c.l.b16 %v2160
      %v2197 = vpack.c.b16 %v2196, %v2182
      %2198 = vrot.lane.b32.xlu0 %v2178, 32
      %v2199 = vpop.permute.xlu0 %2198
      %2200 = vrot.lane.b32.xlu0 %v2179, 32
      %v2201 = vpop.permute.xlu0 %2200
      %2202 = vrot.lane.b32.xlu0 %v2180, 32
      %v2203 = vpop.permute.xlu0 %2202
      %2204 = vrot.lane.b32.xlu0 %v2197, 32
      %v2205 = vpop.permute.xlu0 %2204
      %v2208 = vsel %vm1308, %v2177, %v2188
      %v2211 = vsel %vm1308, %v2178, %v2190
      %v2214 = vsel %vm1308, %v2179, %v2192
      %v2217 = vsel %vm1308, %v2180, %v2194
      %v2219 = vsel %vm1663, %v2208, %v2199
      %v2221 = vsel %vm1663, %v2211, %v2201
      %v2223 = vsel %vm1663, %v2214, %v2203
      %v2225 = vsel %vm1663, %v2217, %v2205
      %v2226 = vld [vmem:[%s7 + $0x18] sm:$0xf]
      %v2227 = vld [vmem:[%s7 + $0x1c] sm:$0xf]
      %v2228 = vld [vmem:[%s7 + $0x20] sm:$0xf]
      %v2229 = vld [vmem:[%s7 + $0x24] sm:$0xf]
      %v2230 = vld [vmem:[%s7 + $0x28] sm:$0xf]
      %v2231 = vld [vmem:[%s7 + $0x2c] sm:$0xf]
      %v2238 = vunpack.c.l.b16 %v2226
      %v2239 = vunpack.c.l.b16 %v2227
      %v2240 = vunpack.c.l.b16 %v2228
      %v2241 = vunpack.c.l.b16 %v2229
      %v2242 = vunpack.c.l.b16 %v2230
      %v2243 = vunpack.c.l.b16 %v2231
      %v2244 = vpack.c.b16 %v2239, %v2238
      %v2245 = vpack.c.b16 %v2241, %v2240
      %v2246 = vpack.c.b16 %v2243, %v2242
      %v2250 = vsel %vm1705, %v2219, 0
      %v2252 = vsel %vm1705, %v2221, 0
      %v2254 = vsel %vm1705, %v2223, 0
      %v2256 = vsel %vm1705, %v2225, 0
      %2258 = vmatprep.subr.bf16.mxu0 0
      %2259 = vmatpush1.bf16.msra.mxu0 0
      %2260 = vmatprep.subr.bf16.mxu0 0
      %2261 = vmatpush1.bf16.msra.mxu0 0
      %2262 = vmatprep.subr.bf16.mxu0 0
      %2263 = vmatpush1.bf16.msra.mxu0 0
      %2264 = vmatprep.subr.bf16.mxu0 0
      %2265 = vmatpush1.bf16.msra.mxu0 0
      %2266 = vmatprep.subr.bf16.mxu0 0
      %2267 = vmatpush1.bf16.msra.mxu0 0
      %2268 = vmatprep.subr.bf16.mxu0 0
      %2269 = vmatpush1.bf16.msra.mxu0 %v2246
      %2270 = vmatprep.subr.bf16.mxu0 0
      %2271 = vmatpush1.bf16.msra.mxu0 %v2245
      %2272 = vmatprep.subr.bf16.mxu0 0
      %2273 = vmatpush1.bf16.msra.mxu0 %v2244
      %2274 = vmatprep.subr.bf16.mxu0 0
      %2275 = vmatpush2.bf16.msra.mxu0 0
      %2276 = vmatprep.subr.bf16.mxu0 0
      %2277 = vmatpush2.bf16.msra.mxu0 0
      %2278 = vmatprep.subr.bf16.mxu0 0
      %2279 = vmatpush2.bf16.msra.mxu0 0
      %2280 = vmatprep.subr.bf16.mxu0 0
      %2281 = vmatpush2.bf16.msra.mxu0 0
      %2282 = vmatprep.subr.bf16.mxu0 0
      %2283 = vmatpush2.bf16.msra.mxu0 0
      %2284 = vmatprep.subr.bf16.mxu0 0
      %2285 = vmatpush2.bf16.msra.mxu0 0
      %2286 = vmatprep.subr.bf16.mxu0 0
      %2287 = vmatpush2.bf16.msra.mxu0 0
      %2288 = vmatprep.subr.bf16.mxu0 0
      %2289 = vmatpush2.bf16.msra.mxu0 0
      %2290 = vmatprep.mubr.bf16.mxu0 0
      %2291 = vmatmul.mubr.bf16.gmra.mxu0 %v2250
      %v2292 = vpop.f32.mrf.mxu0
      %v2293 = vadd.f32 0.0, %v2292
      %v2294 = vpop.f32.mrf.mxu0
      %v2295 = vpop.f32.mrf.mxu0
      %v2296 = vadd.f32 0.0, %v2295
      %v2297 = vpop.f32.mrf.mxu0
      %2298 = vmatprep.mubr.bf16.mxu0 0
      %2299 = vmatmul.mubr.bf16.gmra.mxu0 %v2252
      %v2300 = vpop.f32.mrf.mxu0
      %v2301 = vadd.f32 0.0, %v2300
      %v2302 = vpop.f32.mrf.mxu0
      %v2303 = vpop.f32.mrf.mxu0
      %v2304 = vadd.f32 0.0, %v2303
      %v2305 = vpop.f32.mrf.mxu0
      %2306 = vmatprep.mubr.bf16.mxu0 0
      %2307 = vmatmul.mubr.bf16.gmra.mxu0 %v2254
      %v2308 = vpop.f32.mrf.mxu0
      %v2309 = vadd.f32 0.0, %v2308
      %v2310 = vpop.f32.mrf.mxu0
      %v2311 = vpop.f32.mrf.mxu0
      %v2312 = vadd.f32 0.0, %v2311
      %v2313 = vpop.f32.mrf.mxu0
      %2314 = vmatprep.mubr.bf16.mxu0 0
      %2315 = vmatmul.mubr.bf16.gmra.mxu0 %v2256
      %v2316 = vpop.f32.mrf.mxu0
      %v2317 = vadd.f32 0.0, %v2316
      %v2318 = vpop.f32.mrf.mxu0
      %v2319 = vpop.f32.mrf.mxu0
      %v2320 = vadd.f32 0.0, %v2319
      %v2321 = vpop.f32.mrf.mxu0
      %2322 = vdwg.mxu0
      %v2323 = vld [vmem:[#allocation5] sm:$0xff]
      %v2324 = vld [vmem:[#allocation5 + $0x8] sm:$0xff]
      %v2325 = vld [vmem:[#allocation5 + $0x10] sm:$0xff]
      %v2326 = vld [vmem:[#allocation5 + $0x18] sm:$0xff]
      %v2327 = vld [vmem:[#allocation5 + $0x20] sm:$0xff]
      %v2328 = vld [vmem:[#allocation5 + $0x28] sm:$0xff]
      %v2329 = vld [vmem:[#allocation5 + $0x30] sm:$0xff]
      %v2330 = vld [vmem:[#allocation5 + $0x38] sm:$0xff]
      %v2331 = vadd.f32 %v2323, %v2293
      %v2332 = vadd.f32 %v2324, %v2296
      %v2333 = vadd.f32 %v2325, %v2301
      %v2334 = vadd.f32 %v2326, %v2304
      %v2335 = vadd.f32 %v2327, %v2309
      %v2336 = vadd.f32 %v2328, %v2312
      %v2337 = vadd.f32 %v2329, %v2317
      %v2338 = vadd.f32 %v2330, %v2320
      %2339 = vst.msk [vmem:[#allocation5] sm:$0xff] %vm2142, %v2331
      %2340 = vst.msk [vmem:[#allocation5 + $0x8] sm:$0xff] %vm2142, %v2332
      %2341 = vst.msk [vmem:[#allocation5 + $0x10] sm:$0xff] %vm2142, %v2333
      %2342 = vst.msk [vmem:[#allocation5 + $0x18] sm:$0xff] %vm2142, %v2334
      %2343 = vst.msk [vmem:[#allocation5 + $0x20] sm:$0xff] %vm2142, %v2335
      %2344 = vst.msk [vmem:[#allocation5 + $0x28] sm:$0xff] %vm2142, %v2336
      %2345 = vst.msk [vmem:[#allocation5 + $0x30] sm:$0xff] %vm2142, %v2337
      %2346 = vst.msk [vmem:[#allocation5 + $0x38] sm:$0xff] %vm2142, %v2338
      %v2347 = vld [vmem:[#allocation3 + $0x4] sm:$0xf]
      %v2348 = vld [vmem:[#allocation3 + $0x8] sm:$0xf]
      %v2349 = vld [vmem:[#allocation3 + $0xc] sm:$0xf]
      %v2350 = vld [vmem:[#allocation3 + $0x10] sm:$0xf]
      %v2351 = vld [vmem:[#allocation3 + $0x14] sm:$0xf]
      %v2352 = vld [vmem:[#allocation3 + $0x18] sm:$0xf]
      %v2353 = vld [vmem:[#allocation3 + $0x1c] sm:$0xf]
      %v2354 = vld [vmem:[#allocation3 + $0x20] sm:$0xf]
      %v2355 = vld [vmem:[#allocation3 + $0x24] sm:$0x1]
      %v2356 = vld [vmem:[#allocation3 + $0x24] sm:$0xf]
      %v2357 = vld [vmem:[#allocation3 + $0x28] sm:$0x1]
      %v2358 = vld [vmem:[#allocation3 + $0x28] sm:$0xf]
      %v2359 = vld [vmem:[#allocation3 + $0x2c] sm:$0x1]
      %v2369 = vunpack.c.l.b16 %v2347
      %v2370 = vunpack.c.l.b16 %v2348
      %v2371 = vunpack.c.l.b16 %v2349
      %v2372 = vunpack.c.l.b16 %v2350
      %v2373 = vunpack.c.l.b16 %v2351
      %v2374 = vunpack.c.l.b16 %v2352
      %v2375 = vunpack.c.l.b16 %v2353
      %v2376 = vunpack.c.l.b16 %v2354
      %v2377 = vunpack.c.l.b16 %v2355
      %v2378 = vpack.c.b16 %v2370, %v2369
      %v2379 = vpack.c.b16 %v2372, %v2371
      %v2380 = vpack.c.b16 %v2374, %v2373
      %v2381 = vpack.c.b16 %v2376, %v2375
      %v2382 = vpack.c.b16 %v2377, %v2377
      %v2385 = vunpack.c.l.b16 %v2356
      %v2386 = vunpack.c.l.b16 %v2357
      %v2387 = vpack.c.b16 %v2371, %v2370
      %v2388 = vpack.c.b16 %v2373, %v2372
      %v2389 = vpack.c.b16 %v2375, %v2374
      %v2390 = vpack.c.b16 %v2385, %v2376
      %v2391 = vpack.c.b16 %v2386, %v2386
      %2392 = vrot.lane.b32.xlu0 %v2387, 16
      %v2393 = vpop.permute.xlu0 %2392
      %2394 = vrot.lane.b32.xlu0 %v2388, 16
      %v2395 = vpop.permute.xlu0 %2394
      %2396 = vrot.lane.b32.xlu0 %v2389, 16
      %v2397 = vpop.permute.xlu0 %2396
      %2398 = vrot.lane.b32.xlu0 %v2390, 16
      %v2399 = vpop.permute.xlu0 %2398
      %2400 = vrot.lane.b32.xlu0 %v2391, 16
      %v2401 = vpop.permute.xlu0 %2400
      %v2404 = vunpack.c.l.b16 %v2358
      %v2405 = vunpack.c.l.b16 %v2359
      %v2406 = vpack.c.b16 %v2404, %v2385
      %v2407 = vpack.c.b16 %v2405, %v2405
      %2408 = vrot.lane.b32.xlu0 %v2379, 32
      %v2409 = vpop.permute.xlu0 %2408
      %2410 = vrot.lane.b32.xlu0 %v2380, 32
      %v2411 = vpop.permute.xlu0 %2410
      %2412 = vrot.lane.b32.xlu0 %v2381, 32
      %v2413 = vpop.permute.xlu0 %2412
      %2414 = vrot.lane.b32.xlu0 %v2406, 32
      %v2415 = vpop.permute.xlu0 %2414
      %2416 = vrot.lane.b32.xlu0 %v2407, 32
      %v2417 = vpop.permute.xlu0 %2416
      %v2420 = vsel %vm1308, %v2378, %v2393
      %v2423 = vsel %vm1308, %v2379, %v2395
      %v2426 = vsel %vm1308, %v2380, %v2397
      %v2429 = vsel %vm1308, %v2381, %v2399
      %v2432 = vsel %vm1308, %v2382, %v2401
      %v2434 = vsel %vm1663, %v2420, %v2409
      %v2436 = vsel %vm1663, %v2423, %v2411
      %v2438 = vsel %vm1663, %v2426, %v2413
      %v2440 = vsel %vm1663, %v2429, %v2415
      %v2442 = vsel %vm1663, %v2432, %v2417
      %v2443 = vld [vmem:[%s7 + $0x30] sm:$0xf]
      %v2444 = vld [vmem:[%s7 + $0x34] sm:$0xf]
      %v2445 = vld [vmem:[%s7 + $0x38] sm:$0xf]
      %v2446 = vld [vmem:[%s7 + $0x3c] sm:$0xf]
      %v2447 = vld [vmem:[%s7 + $0x40] sm:$0xf]
      %v2448 = vld [vmem:[%s7 + $0x44] sm:$0xf]
      %vm2449 = vsmask.f32 7424
      %v2450 = vshrl.u32 %v2434, 16
      %v2452 = vshll.u32 %v2434, 16
      %v2454 = vrot.slane %v2452, 1
      %v2455 = vor.u32 %v2450, %v2454
      %v2456 = vshll.u32 %v2436, 16
      %v2458 = vrot.slane %v2456, 1
      %v2459 = vsel %vm2449, %v2455, %v2458
      %v2460 = vshrl.u32 %v2436, 16
      %v2462 = vor.u32 %v2460, %v2458
      %v2463 = vshll.u32 %v2438, 16
      %v2465 = vrot.slane %v2463, 1
      %v2466 = vsel %vm2449, %v2462, %v2465
      %v2467 = vshrl.u32 %v2438, 16
      %v2469 = vor.u32 %v2467, %v2465
      %v2470 = vshll.u32 %v2440, 16
      %v2472 = vrot.slane %v2470, 1
      %v2473 = vsel %vm2449, %v2469, %v2472
      %v2474 = vshrl.u32 %v2440, 16
      %v2476 = vor.u32 %v2474, %v2472
      %v2477 = vshll.u32 %v2442, 16
      %v2479 = vrot.slane %v2477, 1
      %v2480 = vsel %vm2449, %v2476, %v2479
      %v2487 = vunpack.c.l.b16 %v2443
      %v2488 = vunpack.c.l.b16 %v2444
      %v2489 = vunpack.c.l.b16 %v2445
      %v2490 = vunpack.c.l.b16 %v2446
      %v2491 = vunpack.c.l.b16 %v2447
      %v2492 = vunpack.c.l.b16 %v2448
      %v2493 = vpack.c.b16 %v2488, %v2487
      %v2494 = vpack.c.b16 %v2490, %v2489
      %v2495 = vpack.c.b16 %v2492, %v2491
      %v2500 = vsel %vm1705, %v2459, 0
      %v2503 = vsel %vm1705, %v2466, 0
      %v2506 = vsel %vm1705, %v2473, 0
      %v2509 = vsel %vm1705, %v2480, 0
      %2511 = vmatprep.subr.bf16.mxu0 0
      %2512 = vmatpush1.bf16.msra.mxu0 0
      %2513 = vmatprep.subr.bf16.mxu0 0
      %2514 = vmatpush1.bf16.msra.mxu0 0
      %2515 = vmatprep.subr.bf16.mxu0 0
      %2516 = vmatpush1.bf16.msra.mxu0 0
      %2517 = vmatprep.subr.bf16.mxu0 0
      %2518 = vmatpush1.bf16.msra.mxu0 0
      %2519 = vmatprep.subr.bf16.mxu0 0
      %2520 = vmatpush1.bf16.msra.mxu0 0
      %2521 = vmatprep.subr.bf16.mxu0 0
      %2522 = vmatpush1.bf16.msra.mxu0 %v2495
      %2523 = vmatprep.subr.bf16.mxu0 0
      %2524 = vmatpush1.bf16.msra.mxu0 %v2494
      %2525 = vmatprep.subr.bf16.mxu0 0
      %2526 = vmatpush1.bf16.msra.mxu0 %v2493
      %2527 = vmatprep.subr.bf16.mxu0 0
      %2528 = vmatpush2.bf16.msra.mxu0 0
      %2529 = vmatprep.subr.bf16.mxu0 0
      %2530 = vmatpush2.bf16.msra.mxu0 0
      %2531 = vmatprep.subr.bf16.mxu0 0
      %2532 = vmatpush2.bf16.msra.mxu0 0
      %2533 = vmatprep.subr.bf16.mxu0 0
      %2534 = vmatpush2.bf16.msra.mxu0 0
      %2535 = vmatprep.subr.bf16.mxu0 0
      %2536 = vmatpush2.bf16.msra.mxu0 0
      %2537 = vmatprep.subr.bf16.mxu0 0
      %2538 = vmatpush2.bf16.msra.mxu0 0
      %2539 = vmatprep.subr.bf16.mxu0 0
      %2540 = vmatpush2.bf16.msra.mxu0 0
      %2541 = vmatprep.subr.bf16.mxu0 0
      %2542 = vmatpush2.bf16.msra.mxu0 0
      %2543 = vmatprep.mubr.bf16.mxu0 0
      %2544 = vmatmul.mubr.bf16.gmra.mxu0 %v2500
      %v2545 = vpop.f32.mrf.mxu0
      %v2546 = vadd.f32 0.0, %v2545
      %v2547 = vpop.f32.mrf.mxu0
      %v2548 = vpop.f32.mrf.mxu0
      %v2549 = vadd.f32 0.0, %v2548
      %v2550 = vpop.f32.mrf.mxu0
      %2551 = vmatprep.mubr.bf16.mxu0 0
      %2552 = vmatmul.mubr.bf16.gmra.mxu0 %v2503
      %v2553 = vpop.f32.mrf.mxu0
      %v2554 = vadd.f32 0.0, %v2553
      %v2555 = vpop.f32.mrf.mxu0
      %v2556 = vpop.f32.mrf.mxu0
      %v2557 = vadd.f32 0.0, %v2556
      %v2558 = vpop.f32.mrf.mxu0
      %2559 = vmatprep.mubr.bf16.mxu0 0
      %2560 = vmatmul.mubr.bf16.gmra.mxu0 %v2506
      %v2561 = vpop.f32.mrf.mxu0
      %v2562 = vadd.f32 0.0, %v2561
      %v2563 = vpop.f32.mrf.mxu0
      %v2564 = vpop.f32.mrf.mxu0
      %v2565 = vadd.f32 0.0, %v2564
      %v2566 = vpop.f32.mrf.mxu0
      %2567 = vmatprep.mubr.bf16.mxu0 0
      %2568 = vmatmul.mubr.bf16.gmra.mxu0 %v2509
      %v2569 = vpop.f32.mrf.mxu0
      %v2570 = vadd.f32 0.0, %v2569
      %v2571 = vpop.f32.mrf.mxu0
      %v2572 = vpop.f32.mrf.mxu0
      %v2573 = vadd.f32 0.0, %v2572
      %v2574 = vpop.f32.mrf.mxu0
      %2575 = vdwg.mxu0
      %v2576 = vmul.f32 %v2546, %v1189
      %v2577 = vmul.f32 %v2549, %v1190
      %v2578 = vmul.f32 %v2554, %v1191
      %v2579 = vmul.f32 %v2557, %v1192
      %v2580 = vmul.f32 %v2562, %v1193
      %v2581 = vmul.f32 %v2565, %v1194
      %v2582 = vmul.f32 %v2570, %v1195
      %v2583 = vmul.f32 %v2573, %v1196
      %v2584 = vld [vmem:[#allocation5] sm:$0xff]
      %v2585 = vld [vmem:[#allocation5 + $0x8] sm:$0xff]
      %v2586 = vld [vmem:[#allocation5 + $0x10] sm:$0xff]
      %v2587 = vld [vmem:[#allocation5 + $0x18] sm:$0xff]
      %v2588 = vld [vmem:[#allocation5 + $0x20] sm:$0xff]
      %v2589 = vld [vmem:[#allocation5 + $0x28] sm:$0xff]
      %v2590 = vld [vmem:[#allocation5 + $0x30] sm:$0xff]
      %v2591 = vld [vmem:[#allocation5 + $0x38] sm:$0xff]
      %v2592 = vadd.f32 %v2584, %v2576
      %v2593 = vadd.f32 %v2585, %v2577
      %v2594 = vadd.f32 %v2586, %v2578
      %v2595 = vadd.f32 %v2587, %v2579
      %v2596 = vadd.f32 %v2588, %v2580
      %v2597 = vadd.f32 %v2589, %v2581
      %v2598 = vadd.f32 %v2590, %v2582
      %v2599 = vadd.f32 %v2591, %v2583
      %2600 = vst.msk [vmem:[#allocation5] sm:$0xff] %vm2142, %v2592
      %2601 = vst.msk [vmem:[#allocation5 + $0x8] sm:$0xff] %vm2142, %v2593
      %2602 = vst.msk [vmem:[#allocation5 + $0x10] sm:$0xff] %vm2142, %v2594
      %2603 = vst.msk [vmem:[#allocation5 + $0x18] sm:$0xff] %vm2142, %v2595
      %2604 = vst.msk [vmem:[#allocation5 + $0x20] sm:$0xff] %vm2142, %v2596
      %2605 = vst.msk [vmem:[#allocation5 + $0x28] sm:$0xff] %vm2142, %v2597
      %2606 = vst.msk [vmem:[#allocation5 + $0x30] sm:$0xff] %vm2142, %v2598
      %2607 = vst.msk [vmem:[#allocation5 + $0x38] sm:$0xff] %vm2142, %v2599
      %v2608 = vld [vmem:[#allocation5] sm:$0xff]
      %v2609 = vld [vmem:[#allocation5 + $0x8] sm:$0xff]
      %v2610 = vld [vmem:[#allocation5 + $0x10] sm:$0xff]
      %v2611 = vld [vmem:[#allocation5 + $0x18] sm:$0xff]
      %v2612 = vld [vmem:[#allocation5 + $0x20] sm:$0xff]
      %v2613 = vld [vmem:[#allocation5 + $0x28] sm:$0xff]
      %v2614 = vld [vmem:[#allocation5 + $0x30] sm:$0xff]
      %v2615 = vld [vmem:[#allocation5 + $0x38] sm:$0xff]
      %v2616 = vld [vmem:[%s8] sm:$0x1]
      %v2618 = vlaneseq
      %v2619 = vshrl.u32 %v2618, 7
      %v2620 = vsub.s32 0, %v2619
      %v2621 = vrot.slane %v2616, %v2620
      %v2623 = vadd.f32 %v2608, %v2621
      %v2624 = vadd.f32 %v2609, %v2621
      %v2625 = vadd.f32 %v2610, %v2621
      %v2626 = vadd.f32 %v2611, %v2621
      %v2627 = vadd.f32 %v2612, %v2621
      %v2628 = vadd.f32 %v2613, %v2621
      %v2629 = vadd.f32 %v2614, %v2621
      %v2630 = vadd.f32 %v2615, %v2621
      %2631 = vxpose.xlu0.b32.start [1/16] %v2623, 128
      %2632 = vxpose.xlu0.b32.cont [2/16] %v2624, 128
      %2633 = vxpose.xlu0.b32.cont [3/16] %v2625, 128
      %2634 = vxpose.xlu0.b32.cont [4/16] %v2626, 128
      %2635 = vxpose.xlu0.b32.cont [5/16] %v2627, 128
      %2636 = vxpose.xlu0.b32.cont [6/16] %v2628, 128
      %2637 = vxpose.xlu0.b32.cont [7/16] %v2629, 128
      %2638 = vxpose.xlu0.b32.cont [8/16] %v2630, 128
      %2639 = vxpose.xlu0.b32.cont [9/16] 0.0, 128
      %2640 = vxpose.xlu0.b32.cont [10/16] 0.0, 128
      %2641 = vxpose.xlu0.b32.cont [11/16] 0.0, 128
      %2642 = vxpose.xlu0.b32.cont [12/16] 0.0, 128
      %2643 = vxpose.xlu0.b32.cont [13/16] 0.0, 128
      %2644 = vxpose.xlu0.b32.cont [14/16] 0.0, 128
      %2645 = vxpose.xlu0.b32.cont [15/16] 0.0, 128
      %2646 = vxpose.xlu0.b32.end [16/16] 0.0, 128
      %v2647 = vpop.trf.xlu0
      %v2648 = vpop.trf.xlu0
      %v2649 = vpop.trf.xlu0
      %v2650 = vpop.trf.xlu0
      %v2651 = vpop.trf.xlu0
      %v2652 = vpop.trf.xlu0
      %v2653 = vpop.trf.xlu0
      %v2654 = vpop.trf.xlu0
      %v2655 = vpop.trf.xlu0
      %v2656 = vpop.trf.xlu0
      %v2657 = vpop.trf.xlu0
      %v2658 = vpop.trf.xlu0
      %v2659 = vpop.trf.xlu0
      %v2660 = vpop.trf.xlu0
      %v2661 = vpop.trf.xlu0
      %v2662 = vpop.trf.xlu0
      %vm2663 = vcmask 523264
      %2664 = vst.msk [vmem:[%s372] sm:$0xff] %vm2663, %v2647
      %2665 = vst.msk [vmem:[%s372 + $0x8] sm:$0xff] %vm2663, %v2648
      %2666 = vst.msk [vmem:[%s372 + $0x10] sm:$0xff] %vm2663, %v2649
      %vm2667 = vcmask 519168
      %2668 = vst.msk [vmem:[%s372 + $0x18] sm:$0xf] %vm2667, %v2650
      %p2669 = scmp.lt.s32.totalorder %s22, 1
      %s2670 = scalar_select %p2669, %s22, 1
      %s2671 = smul.addr %s2670, 8
      %s2672 = smul.addr %s2671, 8
      %s2673 = scalar_lea.vmem %s9, %s2672
      %p2674 = scmp.lt.s32.totalorder %s22, 1
      %s2675 = scalar_select %p2674, %s22, 1
      %s2676 = smul.addr %s2675, 4
      %s2677 = smul.addr %s2676, 8
      %s2678 = scalar_lea.vmem %s10, %s2677
      // Predicated region
      $region57: #{tpu_custom_call.1} parent=55 // pred_check
        %p2679 = pneg %p234
      $region58: #{tpu_custom_call.1} parent=55 // pred_check_branch
        %2681 = sbr.rel (%p2679) target = $region60
      $region59: #{tpu_custom_call.1} parent=55 // pred_region
        _
      $region60: #{tpu_custom_call.1} parent=55 // pred_fallthru
        _
      // Predicated region
      $region61: #{tpu_custom_call.1} parent=55 // pred_check
        %p2682 = pneg %p260
      $region62: #{tpu_custom_call.1} parent=55 // pred_check_branch
        %2684 = sbr.rel (%p2682) target = $region64
      $region63: #{tpu_custom_call.1} parent=55 // pred_region
        _
      $region64: #{tpu_custom_call.1} parent=55 // pred_fallthru
        _
    $region56: #{tpu_custom_call.1} parent=5 // pred_fallthru
      _
    %p2685 = scmp.le.s32.totalorder 2, %s17
    // Predicated region
    $region65: #{tpu_custom_call.1} parent=5 // pred_check
      %p2686 = pneg %p2685
    $region66: #{tpu_custom_call.1} parent=5 // pred_check_branch
      %2688 = sbr.rel (%p2686) target = $region68
    $region67: #{tpu_custom_call.1} parent=5 // pred_region
      %s2689 = ssub.s32 %s17, 2
      // Predicated region
      $region69: #{tpu_custom_call.1} parent=67 // pred_check
        %p2690 = pneg %p240
      $region70: #{tpu_custom_call.1} parent=67 // pred_check_branch
        %2692 = sbr.rel (%p2690) target = $region72
      $region71: #{tpu_custom_call.1} parent=67 // pred_region
        %p2693 = scmp.lt.s32.totalorder %s23, 1
        %s2694 = scalar_select %p2693, %s23, 1
        %s2695 = smul.addr %s2694, 8
        %s2696 = smul.addr %s2695, 8
        %s2697 = scalar_lea.vmem %s9, %s2696
      $region72: #{tpu_custom_call.1} parent=67 // pred_fallthru
        _
      // Predicated region
      $region73: #{tpu_custom_call.1} parent=67 // pred_check
        %p2698 = pneg %p266
      $region74: #{tpu_custom_call.1} parent=67 // pred_check_branch
        %2700 = sbr.rel (%p2698) target = $region76
      $region75: #{tpu_custom_call.1} parent=67 // pred_region
        %p2701 = scmp.lt.s32.totalorder %s23, 1
        %s2702 = scalar_select %p2701, %s23, 1
        %s2703 = smul.addr %s2702, 4
        %s2704 = smul.addr %s2703, 8
        %s2705 = scalar_lea.vmem %s10, %s2704
      $region76: #{tpu_custom_call.1} parent=67 // pred_fallthru
        _
    $region68: #{tpu_custom_call.1} parent=5 // pred_fallthru
      _
  $region6: #{tpu_custom_call.1} parent=0 // loop_footer
    %s21 = sadd.s32 1, %s17
  $region7: #{tpu_custom_call.1} parent=0 // loop_footer_branch
    %16 = sbr.rel target = $region3
  $region8: #{tpu_custom_call.1} parent=0 // loop_exit
    _

</llo_original>
